<compile_context>
chip_gen: v7x
topology: tpu7x:2x2x1
jax: 0.10.0
libtpu: 0.0.40
codegen_flags: <defaults>
</compile_context>

<pallas_src>
import functools

import jax
import jax.numpy as jnp
from jax import lax
from jax.experimental import pallas as pl
from jax.experimental.pallas import tpu as pltpu


def _round_up(x, m):
    return (x + m - 1) // m * m


def _make_cbow_kernel(batch, n_ctx, n_neg, tile_b, v_pad, d_pad):
    """Kernel factory closing over the static problem sizes."""

    def kernel(tgt_ref, ctx_ref, neg_ref, ctx_w_ref, out_wt_ref, loss_ref):
        i = pl.program_id(0)
        base = i * tile_b

        iota_v = lax.broadcasted_iota(jnp.int32, (tile_b, v_pad), 1)

        # Context multiplicity counts -> one MXU matmul for the summed context embeddings.
        counts = jnp.zeros((tile_b, v_pad), jnp.float32)
        for c in range(n_ctx):
            counts = counts + (ctx_ref[:, c:c + 1] == iota_v).astype(jnp.float32)
        ctx_sum = jnp.dot(counts, ctx_w_ref[...],
                          preferred_element_type=jnp.float32,
                          precision=jax.lax.Precision.HIGHEST)          # (TB, Dp)

        # Scores against the whole (padded) vocabulary; target / negative scores are
        # one-hot masked lane reductions of this single matmul result.
        scores_all = jnp.dot(ctx_sum, out_wt_ref[...],
                             preferred_element_type=jnp.float32,
                             precision=jax.lax.Precision.HIGHEST)       # (TB, Vp)

        def select(idx_col):  # (TB, 1) int32 -> (TB, 1) f32 score
            onehot = idx_col == iota_v
            return jnp.sum(jnp.where(onehot, scores_all, 0.0), axis=-1, keepdims=True)

        def neg_log_sigmoid(z):  # stable -logsigmoid(z)
            return jnp.log1p(jnp.exp(-jnp.abs(z))) - jnp.minimum(z, 0.0)

        pos_score = jnp.clip(select(tgt_ref[...]), -10.0, 10.0)
        row_loss = neg_log_sigmoid(pos_score)                           # (TB, 1)
        for n in range(n_neg):
            sn = jnp.clip(select(neg_ref[:, n:n + 1]), -10.0, 10.0)
            row_loss = row_loss + neg_log_sigmoid(-sn)

        # Mask padded batch rows of the last tile and emit this tile's partial sum.
        rows = base + lax.broadcasted_iota(jnp.int32, (tile_b, 1), 0)
        valid = (rows < batch).astype(jnp.float32)
        partial = jnp.sum(row_loss * valid, axis=0, keepdims=True)      # (1, 1)
        loss_ref[...] = jnp.broadcast_to(partial[None], (1, 8, 128))

    return kernel


def cbow_forward(context_weight, output_weight, pos_target, pos_contexts,
                 pos_negatives, *, tile_b=None):
    """Scalar negative-sampling loss, matching Cbow.forward."""
    vocab, dim = context_weight.shape
    batch = pos_target.shape[0]
    n_ctx = pos_contexts.shape[1]
    n_neg = pos_negatives.shape[1]

    if tile_b is None:
        tile_b = min(256, _round_up(batch, 8))
    tile_b = _round_up(tile_b, 8)
    n_tiles = -(-batch // tile_b)
    b_pad = n_tiles * tile_b
    pad = b_pad - batch

    v_pad = _round_up(vocab, 128)
    d_pad = _round_up(dim, 128)

    # Zero-pad the tables (layout only: padded vocab rows are never indexed, padded
    # embedding columns contribute 0 to every dot product).  The output table is
    # pre-transposed so the score matmul is a plain (TB, Dp) x (Dp, Vp) MXU pass.
    ctx_w = jnp.pad(context_weight.astype(jnp.float32),
                    ((0, v_pad - vocab), (0, d_pad - dim)))
    out_wt = jnp.pad(output_weight.astype(jnp.float32),
                     ((0, v_pad - vocab), (0, d_pad - dim))).T

    # Per-tile blocked int32 index inputs (padded rows gather index 0, masked in-kernel).
    tgt = jnp.pad(pos_target.astype(jnp.int32), (0, pad)).reshape(b_pad, 1)
    ctx = jnp.pad(pos_contexts.astype(jnp.int32), ((0, pad), (0, 0)))
    neg = jnp.pad(pos_negatives.astype(jnp.int32), ((0, pad), (0, 0)))

    kernel = _make_cbow_kernel(batch, n_ctx, n_neg, tile_b, v_pad, d_pad)

    # VMEM budget: resident tables (x2 for potential double buffering), pipelined index /
    # output blocks, (TB, Vp) intermediates, plus headroom; never below the 32 MiB default.
    tables_bytes = 2 * v_pad * d_pad * 4
    blocks_bytes = 2 * (tile_b * (1 + n_ctx + n_neg) * 4 + 8 * 128 * 4)
    interm_bytes = (6 * v_pad + 4 * d_pad) * tile_b * 4
    vmem_limit = int(min(128 << 20,
                         max(32 << 20,
                             2 * tables_bytes + blocks_bytes + interm_bytes + (4 << 20))))

    cost = pl.CostEstimate(
        flops=4 * b_pad * v_pad * d_pad + 2 * b_pad * v_pad * (n_ctx + n_neg + 1),
        transcendentals=2 * b_pad * (n_neg + 1),
        bytes_accessed=tables_bytes + b_pad * (1 + n_ctx + n_neg) * 4 + n_tiles * 8 * 128 * 4,
    )

    partials = pl.pallas_call(
        kernel,
        out_shape=jax.ShapeDtypeStruct((n_tiles, 8, 128), jnp.float32),
        grid=(n_tiles,),
        in_specs=[
            pl.BlockSpec((tile_b, 1), lambda i: (i, 0)),
            pl.BlockSpec((tile_b, n_ctx), lambda i: (i, 0)),
            pl.BlockSpec((tile_b, n_neg), lambda i: (i, 0)),
            pl.BlockSpec((v_pad, d_pad), lambda i: (0, 0)),   # VMEM-resident ctx table
            pl.BlockSpec((d_pad, v_pad), lambda i: (0, 0)),   # VMEM-resident out^T table
        ],
        out_specs=pl.BlockSpec((1, 8, 128), lambda i: (i, 0, 0)),
        compiler_params=pltpu.CompilerParams(
            dimension_semantics=("parallel",),      # independent tiles -> both TCs on v7x
            vmem_limit_bytes=vmem_limit),
        cost_estimate=cost,
    )(tgt, ctx, neg, ctx_w, out_wt)

    return jnp.sum(partials[:, 0, 0]) / batch


def reference_forward(context_weight, output_weight, pos_target, pos_contexts,
                      pos_negatives):
    """Pure-JAX reference mirroring the PyTorch code line by line (full f32, no MXU)."""
    mean_contexts = jnp.sum(context_weight[pos_contexts], axis=1)
    emb_context_target = output_weight[pos_target]
    emb_negative_targets = output_weight[pos_negatives]
    objective = jnp.sum(mean_contexts * emb_context_target, axis=1)
    objective = jnp.clip(objective, -10.0, 10.0)
    objective = -jax.nn.log_sigmoid(objective)
    neg_scores = jnp.sum(emb_negative_targets * mean_contexts[:, None, :], axis=-1)
    neg_scores = jnp.clip(neg_scores, -10.0, 10.0)
    neg_objective = -jnp.sum(jax.nn.log_sigmoid(-neg_scores), axis=1)
    return jnp.mean(objective + neg_objective)


if __name__ == "__main__":
    num_targets = 16
    vocab_size = 32
    embedding_dimension = 32
    B, C, N = 24, 4, 6   # batch, context window, negatives

    key = jax.random.PRNGKey(0)
    k_tgt, k_ctx, k_out, k_it, k_ic, k_in = jax.random.split(key, 6)

    initrange = 1.0 / embedding_dimension
    # target_embeddings: uniform(-1/D, 1/D) as in __init__ (unused in forward).
    target_weight = jax.random.uniform(
        k_tgt, (num_targets, embedding_dimension),
        minval=-initrange, maxval=initrange, dtype=jnp.float32)
    # NOTE: the PyTorch __init__ zeroes context_embeddings, which makes the forward loss a
    # constant; use small random values so the compute path is non-trivial (semantics of the
    # forward pass are unchanged).
    context_weight = 0.1 * jax.random.normal(
        k_ctx, (vocab_size, embedding_dimension), dtype=jnp.float32)
    # output_layer: default nn.Embedding init ~ N(0, 1).
    output_weight = jax.random.normal(
        k_out, (vocab_size, embedding_dimension), dtype=jnp.float32)

    pos_target = jax.random.randint(k_it, (B,), 0, vocab_size)
    pos_contexts = jax.random.randint(k_ic, (B, C), 0, vocab_size)
    pos_negatives = jax.random.randint(k_in, (B, N), 0, vocab_size)

    # tile_b=16 deliberately does not divide B=24: exercises the multi-tile parallel grid,
    # per-tile partial outputs, and padded-row masking in the last tile.
    fwd = jax.jit(functools.partial(cbow_forward, tile_b=16))
    loss = jax.block_until_ready(fwd(context_weight, output_weight,
                                     pos_target, pos_contexts, pos_negatives))

    ref = reference_forward(context_weight, output_weight, pos_target,
                            pos_contexts, pos_negatives)
    assert jnp.allclose(loss, ref, rtol=1e-4, atol=1e-4), (loss, ref)

    print("KERNEL_OK")
</pallas_src>

<mosaic_0001>
module attributes {stable_mosaic.version = 11 : i64} {
  func.func @kernel(%arg0: i32, %arg1: memref<16x1xi32, #tpu.memory_space<vmem>>, %arg2: memref<16x4xi32, #tpu.memory_space<vmem>>, %arg3: memref<16x6xi32, #tpu.memory_space<vmem>>, %arg4: memref<128x128xf32, #tpu.memory_space<vmem>>, %arg5: memref<128x128xf32, #tpu.memory_space<vmem>>, %arg6: memref<1x8x128xf32, #tpu.memory_space<vmem>>) attributes {dimension_semantics = [#tpu.dimension_semantics<parallel>], iteration_bounds = array<i64: 2>, scalar_prefetch = 0 : i64, scratch_operands = 0 : i64, tpu.core_type = #tpu.core_type<tc>, window_params = [{transform_indices = @transform_0, window_bounds = array<i64: 16, 1>}, {transform_indices = @transform_1, window_bounds = array<i64: 16, 4>}, {transform_indices = @transform_2, window_bounds = array<i64: 16, 6>}, {pipeline_mode = #tpu.pipeline_mode<synchronous>, transform_indices = @transform_3, window_bounds = array<i64: 128, 128>}, {pipeline_mode = #tpu.pipeline_mode<synchronous>, transform_indices = @transform_4, window_bounds = array<i64: 128, 128>}, {transform_indices = @transform_5, window_bounds = array<i64: 1, 8, 128>}]} {
    %c16_i32 = arith.constant 16 : i32
    %0 = arith.muli %arg0, %c16_i32 : i32
    %1 = tpu.iota {dimensions = array<i32: 1>} : vector<16x128xi32>
    %cst = arith.constant 0.000000e+00 : f32
    %2 = vector.broadcast %cst : f32 to vector<16x128xf32>
    %c0 = arith.constant 0 : index
    %c0_0 = arith.constant 0 : index
    %3 = vector.load %arg2[%c0, %c0_0] : memref<16x4xi32, #tpu.memory_space<vmem>>, vector<16x1xi32>
    %4 = vector.broadcast %3 : vector<16x1xi32> to vector<16x128xi32>
    %5 = arith.cmpi eq, %4, %1 : vector<16x128xi32>
    %6 = arith.extui %5 : vector<16x128xi1> to vector<16x128xi32>
    %7 = arith.sitofp %6 : vector<16x128xi32> to vector<16x128xf32>
    %8 = arith.addf %2, %7 : vector<16x128xf32>
    %c0_1 = arith.constant 0 : index
    %c1 = arith.constant 1 : index
    %9 = vector.load %arg2[%c0_1, %c1] : memref<16x4xi32, #tpu.memory_space<vmem>>, vector<16x1xi32>
    %10 = vector.broadcast %9 : vector<16x1xi32> to vector<16x128xi32>
    %11 = arith.cmpi eq, %10, %1 : vector<16x128xi32>
    %12 = arith.extui %11 : vector<16x128xi1> to vector<16x128xi32>
    %13 = arith.sitofp %12 : vector<16x128xi32> to vector<16x128xf32>
    %14 = arith.addf %8, %13 : vector<16x128xf32>
    %c0_2 = arith.constant 0 : index
    %c2 = arith.constant 2 : index
    %15 = vector.load %arg2[%c0_2, %c2] : memref<16x4xi32, #tpu.memory_space<vmem>>, vector<16x1xi32>
    %16 = vector.broadcast %15 : vector<16x1xi32> to vector<16x128xi32>
    %17 = arith.cmpi eq, %16, %1 : vector<16x128xi32>
    %18 = arith.extui %17 : vector<16x128xi1> to vector<16x128xi32>
    %19 = arith.sitofp %18 : vector<16x128xi32> to vector<16x128xf32>
    %20 = arith.addf %14, %19 : vector<16x128xf32>
    %c0_3 = arith.constant 0 : index
    %c3 = arith.constant 3 : index
    %21 = vector.load %arg2[%c0_3, %c3] : memref<16x4xi32, #tpu.memory_space<vmem>>, vector<16x1xi32>
    %22 = vector.broadcast %21 : vector<16x1xi32> to vector<16x128xi32>
    %23 = arith.cmpi eq, %22, %1 : vector<16x128xi32>
    %24 = arith.extui %23 : vector<16x128xi1> to vector<16x128xi32>
    %25 = arith.sitofp %24 : vector<16x128xi32> to vector<16x128xf32>
    %26 = arith.addf %20, %25 : vector<16x128xf32>
    %c0_4 = arith.constant 0 : index
    %c0_5 = arith.constant 0 : index
    %27 = vector.load %arg4[%c0_4, %c0_5] : memref<128x128xf32, #tpu.memory_space<vmem>>, vector<128x128xf32>
    %cst_6 = arith.constant dense<0.000000e+00> : vector<16x128xf32>
    %28 = tpu.matmul %26, %27, %cst_6 {dimension_numbers = #tpu.dot_dimension_numbers<[1], [0], [0], [1], [0, 0, 1, 1], [], []>, precision = #tpu.contract_precision<fp32>} : vector<16x128xf32>, vector<128x128xf32>, vector<16x128xf32> -> vector<16x128xf32>
    %c0_7 = arith.constant 0 : index
    %c0_8 = arith.constant 0 : index
    %29 = vector.load %arg5[%c0_7, %c0_8] : memref<128x128xf32, #tpu.memory_space<vmem>>, vector<128x128xf32>
    %cst_9 = arith.constant dense<0.000000e+00> : vector<16x128xf32>
    %30 = tpu.matmul %28, %29, %cst_9 {dimension_numbers = #tpu.dot_dimension_numbers<[1], [0], [0], [1], [0, 0, 1, 1], [], []>, precision = #tpu.contract_precision<fp32>} : vector<16x128xf32>, vector<128x128xf32>, vector<16x128xf32> -> vector<16x128xf32>
    %c0_10 = arith.constant 0 : index
    %c0_11 = arith.constant 0 : index
    %31 = vector.load %arg1[%c0_10, %c0_11] : memref<16x1xi32, #tpu.memory_space<vmem>>, vector<16x1xi32>
    %32 = vector.broadcast %31 : vector<16x1xi32> to vector<16x128xi32>
    %33 = arith.cmpi eq, %32, %1 : vector<16x128xi32>
    %cst_12 = arith.constant 0.000000e+00 : f32
    %34 = vector.broadcast %cst_12 : f32 to vector<16x128xf32>
    %35 = arith.select %33, %30, %34 : vector<16x128xi1>, vector<16x128xf32>
    %cst_13 = arith.constant dense<0.000000e+00> : vector<16xf32>
    %36 = vector.multi_reduction <add>, %35, %cst_13 [1] : vector<16x128xf32> to vector<16xf32>
    %37 = vector.shape_cast %36 : vector<16xf32> to vector<16x1xf32>
    %cst_14 = arith.constant -1.000000e+01 : f32
    %cst_15 = arith.constant 1.000000e+01 : f32
    %38 = vector.broadcast %cst_14 : f32 to vector<16x1xf32>
    %39 = arith.maximumf %38, %37 : vector<16x1xf32>
    %40 = vector.broadcast %cst_15 : f32 to vector<16x1xf32>
    %41 = arith.minimumf %40, %39 : vector<16x1xf32>
    %42 = math.absf %41 : vector<16x1xf32>
    %cst_16 = arith.constant 0.000000e+00 : f32
    %43 = vector.broadcast %cst_16 : f32 to vector<16x1xf32>
    %44 = arith.subf %43, %42 : vector<16x1xf32>
    %45 = math.exp %44 : vector<16x1xf32>
    %46 = math.log1p %45 : vector<16x1xf32>
    %cst_17 = arith.constant 0.000000e+00 : f32
    %47 = vector.broadcast %cst_17 : f32 to vector<16x1xf32>
    %48 = arith.minimumf %41, %47 : vector<16x1xf32>
    %49 = arith.subf %46, %48 : vector<16x1xf32>
    %c0_18 = arith.constant 0 : index
    %c0_19 = arith.constant 0 : index
    %50 = vector.load %arg3[%c0_18, %c0_19] : memref<16x6xi32, #tpu.memory_space<vmem>>, vector<16x1xi32>
    %51 = vector.broadcast %50 : vector<16x1xi32> to vector<16x128xi32>
    %52 = arith.cmpi eq, %51, %1 : vector<16x128xi32>
    %cst_20 = arith.constant 0.000000e+00 : f32
    %53 = vector.broadcast %cst_20 : f32 to vector<16x128xf32>
    %54 = arith.select %52, %30, %53 : vector<16x128xi1>, vector<16x128xf32>
    %cst_21 = arith.constant dense<0.000000e+00> : vector<16xf32>
    %55 = vector.multi_reduction <add>, %54, %cst_21 [1] : vector<16x128xf32> to vector<16xf32>
    %56 = vector.shape_cast %55 : vector<16xf32> to vector<16x1xf32>
    %cst_22 = arith.constant -1.000000e+01 : f32
    %cst_23 = arith.constant 1.000000e+01 : f32
    %57 = vector.broadcast %cst_22 : f32 to vector<16x1xf32>
    %58 = arith.maximumf %57, %56 : vector<16x1xf32>
    %59 = vector.broadcast %cst_23 : f32 to vector<16x1xf32>
    %60 = arith.minimumf %59, %58 : vector<16x1xf32>
    %cst_24 = arith.constant 0.000000e+00 : f32
    %61 = vector.broadcast %cst_24 : f32 to vector<16x1xf32>
    %62 = arith.subf %61, %60 : vector<16x1xf32>
    %63 = math.absf %62 : vector<16x1xf32>
    %cst_25 = arith.constant 0.000000e+00 : f32
    %64 = vector.broadcast %cst_25 : f32 to vector<16x1xf32>
    %65 = arith.subf %64, %63 : vector<16x1xf32>
    %66 = math.exp %65 : vector<16x1xf32>
    %67 = math.log1p %66 : vector<16x1xf32>
    %cst_26 = arith.constant 0.000000e+00 : f32
    %68 = vector.broadcast %cst_26 : f32 to vector<16x1xf32>
    %69 = arith.minimumf %62, %68 : vector<16x1xf32>
    %70 = arith.subf %67, %69 : vector<16x1xf32>
    %71 = arith.addf %49, %70 : vector<16x1xf32>
    %c0_27 = arith.constant 0 : index
    %c1_28 = arith.constant 1 : index
    %72 = vector.load %arg3[%c0_27, %c1_28] : memref<16x6xi32, #tpu.memory_space<vmem>>, vector<16x1xi32>
    %73 = vector.broadcast %72 : vector<16x1xi32> to vector<16x128xi32>
    %74 = arith.cmpi eq, %73, %1 : vector<16x128xi32>
    %cst_29 = arith.constant 0.000000e+00 : f32
    %75 = vector.broadcast %cst_29 : f32 to vector<16x128xf32>
    %76 = arith.select %74, %30, %75 : vector<16x128xi1>, vector<16x128xf32>
    %cst_30 = arith.constant dense<0.000000e+00> : vector<16xf32>
    %77 = vector.multi_reduction <add>, %76, %cst_30 [1] : vector<16x128xf32> to vector<16xf32>
    %78 = vector.shape_cast %77 : vector<16xf32> to vector<16x1xf32>
    %cst_31 = arith.constant -1.000000e+01 : f32
    %cst_32 = arith.constant 1.000000e+01 : f32
    %79 = vector.broadcast %cst_31 : f32 to vector<16x1xf32>
    %80 = arith.maximumf %79, %78 : vector<16x1xf32>
    %81 = vector.broadcast %cst_32 : f32 to vector<16x1xf32>
    %82 = arith.minimumf %81, %80 : vector<16x1xf32>
    %cst_33 = arith.constant 0.000000e+00 : f32
    %83 = vector.broadcast %cst_33 : f32 to vector<16x1xf32>
    %84 = arith.subf %83, %82 : vector<16x1xf32>
    %85 = math.absf %84 : vector<16x1xf32>
    %cst_34 = arith.constant 0.000000e+00 : f32
    %86 = vector.broadcast %cst_34 : f32 to vector<16x1xf32>
    %87 = arith.subf %86, %85 : vector<16x1xf32>
    %88 = math.exp %87 : vector<16x1xf32>
    %89 = math.log1p %88 : vector<16x1xf32>
    %cst_35 = arith.constant 0.000000e+00 : f32
    %90 = vector.broadcast %cst_35 : f32 to vector<16x1xf32>
    %91 = arith.minimumf %84, %90 : vector<16x1xf32>
    %92 = arith.subf %89, %91 : vector<16x1xf32>
    %93 = arith.addf %71, %92 : vector<16x1xf32>
    %c0_36 = arith.constant 0 : index
    %c2_37 = arith.constant 2 : index
    %94 = vector.load %arg3[%c0_36, %c2_37] : memref<16x6xi32, #tpu.memory_space<vmem>>, vector<16x1xi32>
    %95 = vector.broadcast %94 : vector<16x1xi32> to vector<16x128xi32>
    %96 = arith.cmpi eq, %95, %1 : vector<16x128xi32>
    %cst_38 = arith.constant 0.000000e+00 : f32
    %97 = vector.broadcast %cst_38 : f32 to vector<16x128xf32>
    %98 = arith.select %96, %30, %97 : vector<16x128xi1>, vector<16x128xf32>
    %cst_39 = arith.constant dense<0.000000e+00> : vector<16xf32>
    %99 = vector.multi_reduction <add>, %98, %cst_39 [1] : vector<16x128xf32> to vector<16xf32>
    %100 = vector.shape_cast %99 : vector<16xf32> to vector<16x1xf32>
    %cst_40 = arith.constant -1.000000e+01 : f32
    %cst_41 = arith.constant 1.000000e+01 : f32
    %101 = vector.broadcast %cst_40 : f32 to vector<16x1xf32>
    %102 = arith.maximumf %101, %100 : vector<16x1xf32>
    %103 = vector.broadcast %cst_41 : f32 to vector<16x1xf32>
    %104 = arith.minimumf %103, %102 : vector<16x1xf32>
    %cst_42 = arith.constant 0.000000e+00 : f32
    %105 = vector.broadcast %cst_42 : f32 to vector<16x1xf32>
    %106 = arith.subf %105, %104 : vector<16x1xf32>
    %107 = math.absf %106 : vector<16x1xf32>
    %cst_43 = arith.constant 0.000000e+00 : f32
    %108 = vector.broadcast %cst_43 : f32 to vector<16x1xf32>
    %109 = arith.subf %108, %107 : vector<16x1xf32>
    %110 = math.exp %109 : vector<16x1xf32>
    %111 = math.log1p %110 : vector<16x1xf32>
    %cst_44 = arith.constant 0.000000e+00 : f32
    %112 = vector.broadcast %cst_44 : f32 to vector<16x1xf32>
    %113 = arith.minimumf %106, %112 : vector<16x1xf32>
    %114 = arith.subf %111, %113 : vector<16x1xf32>
    %115 = arith.addf %93, %114 : vector<16x1xf32>
    %c0_45 = arith.constant 0 : index
    %c3_46 = arith.constant 3 : index
    %116 = vector.load %arg3[%c0_45, %c3_46] : memref<16x6xi32, #tpu.memory_space<vmem>>, vector<16x1xi32>
    %117 = vector.broadcast %116 : vector<16x1xi32> to vector<16x128xi32>
    %118 = arith.cmpi eq, %117, %1 : vector<16x128xi32>
    %cst_47 = arith.constant 0.000000e+00 : f32
    %119 = vector.broadcast %cst_47 : f32 to vector<16x128xf32>
    %120 = arith.select %118, %30, %119 : vector<16x128xi1>, vector<16x128xf32>
    %cst_48 = arith.constant dense<0.000000e+00> : vector<16xf32>
    %121 = vector.multi_reduction <add>, %120, %cst_48 [1] : vector<16x128xf32> to vector<16xf32>
    %122 = vector.shape_cast %121 : vector<16xf32> to vector<16x1xf32>
    %cst_49 = arith.constant -1.000000e+01 : f32
    %cst_50 = arith.constant 1.000000e+01 : f32
    %123 = vector.broadcast %cst_49 : f32 to vector<16x1xf32>
    %124 = arith.maximumf %123, %122 : vector<16x1xf32>
    %125 = vector.broadcast %cst_50 : f32 to vector<16x1xf32>
    %126 = arith.minimumf %125, %124 : vector<16x1xf32>
    %cst_51 = arith.constant 0.000000e+00 : f32
    %127 = vector.broadcast %cst_51 : f32 to vector<16x1xf32>
    %128 = arith.subf %127, %126 : vector<16x1xf32>
    %129 = math.absf %128 : vector<16x1xf32>
    %cst_52 = arith.constant 0.000000e+00 : f32
    %130 = vector.broadcast %cst_52 : f32 to vector<16x1xf32>
    %131 = arith.subf %130, %129 : vector<16x1xf32>
    %132 = math.exp %131 : vector<16x1xf32>
    %133 = math.log1p %132 : vector<16x1xf32>
    %cst_53 = arith.constant 0.000000e+00 : f32
    %134 = vector.broadcast %cst_53 : f32 to vector<16x1xf32>
    %135 = arith.minimumf %128, %134 : vector<16x1xf32>
    %136 = arith.subf %133, %135 : vector<16x1xf32>
    %137 = arith.addf %115, %136 : vector<16x1xf32>
    %c0_54 = arith.constant 0 : index
    %c4 = arith.constant 4 : index
    %138 = vector.load %arg3[%c0_54, %c4] : memref<16x6xi32, #tpu.memory_space<vmem>>, vector<16x1xi32>
    %139 = vector.broadcast %138 : vector<16x1xi32> to vector<16x128xi32>
    %140 = arith.cmpi eq, %139, %1 : vector<16x128xi32>
    %cst_55 = arith.constant 0.000000e+00 : f32
    %141 = vector.broadcast %cst_55 : f32 to vector<16x128xf32>
    %142 = arith.select %140, %30, %141 : vector<16x128xi1>, vector<16x128xf32>
    %cst_56 = arith.constant dense<0.000000e+00> : vector<16xf32>
    %143 = vector.multi_reduction <add>, %142, %cst_56 [1] : vector<16x128xf32> to vector<16xf32>
    %144 = vector.shape_cast %143 : vector<16xf32> to vector<16x1xf32>
    %cst_57 = arith.constant -1.000000e+01 : f32
    %cst_58 = arith.constant 1.000000e+01 : f32
    %145 = vector.broadcast %cst_57 : f32 to vector<16x1xf32>
    %146 = arith.maximumf %145, %144 : vector<16x1xf32>
    %147 = vector.broadcast %cst_58 : f32 to vector<16x1xf32>
    %148 = arith.minimumf %147, %146 : vector<16x1xf32>
    %cst_59 = arith.constant 0.000000e+00 : f32
    %149 = vector.broadcast %cst_59 : f32 to vector<16x1xf32>
    %150 = arith.subf %149, %148 : vector<16x1xf32>
    %151 = math.absf %150 : vector<16x1xf32>
    %cst_60 = arith.constant 0.000000e+00 : f32
    %152 = vector.broadcast %cst_60 : f32 to vector<16x1xf32>
    %153 = arith.subf %152, %151 : vector<16x1xf32>
    %154 = math.exp %153 : vector<16x1xf32>
    %155 = math.log1p %154 : vector<16x1xf32>
    %cst_61 = arith.constant 0.000000e+00 : f32
    %156 = vector.broadcast %cst_61 : f32 to vector<16x1xf32>
    %157 = arith.minimumf %150, %156 : vector<16x1xf32>
    %158 = arith.subf %155, %157 : vector<16x1xf32>
    %159 = arith.addf %137, %158 : vector<16x1xf32>
    %c0_62 = arith.constant 0 : index
    %c5 = arith.constant 5 : index
    %160 = vector.load %arg3[%c0_62, %c5] : memref<16x6xi32, #tpu.memory_space<vmem>>, vector<16x1xi32>
    %161 = vector.broadcast %160 : vector<16x1xi32> to vector<16x128xi32>
    %162 = arith.cmpi eq, %161, %1 : vector<16x128xi32>
    %cst_63 = arith.constant 0.000000e+00 : f32
    %163 = vector.broadcast %cst_63 : f32 to vector<16x128xf32>
    %164 = arith.select %162, %30, %163 : vector<16x128xi1>, vector<16x128xf32>
    %cst_64 = arith.constant dense<0.000000e+00> : vector<16xf32>
    %165 = vector.multi_reduction <add>, %164, %cst_64 [1] : vector<16x128xf32> to vector<16xf32>
    %166 = vector.shape_cast %165 : vector<16xf32> to vector<16x1xf32>
    %cst_65 = arith.constant -1.000000e+01 : f32
    %cst_66 = arith.constant 1.000000e+01 : f32
    %167 = vector.broadcast %cst_65 : f32 to vector<16x1xf32>
    %168 = arith.maximumf %167, %166 : vector<16x1xf32>
    %169 = vector.broadcast %cst_66 : f32 to vector<16x1xf32>
    %170 = arith.minimumf %169, %168 : vector<16x1xf32>
    %cst_67 = arith.constant 0.000000e+00 : f32
    %171 = vector.broadcast %cst_67 : f32 to vector<16x1xf32>
    %172 = arith.subf %171, %170 : vector<16x1xf32>
    %173 = math.absf %172 : vector<16x1xf32>
    %cst_68 = arith.constant 0.000000e+00 : f32
    %174 = vector.broadcast %cst_68 : f32 to vector<16x1xf32>
    %175 = arith.subf %174, %173 : vector<16x1xf32>
    %176 = math.exp %175 : vector<16x1xf32>
    %177 = math.log1p %176 : vector<16x1xf32>
    %cst_69 = arith.constant 0.000000e+00 : f32
    %178 = vector.broadcast %cst_69 : f32 to vector<16x1xf32>
    %179 = arith.minimumf %172, %178 : vector<16x1xf32>
    %180 = arith.subf %177, %179 : vector<16x1xf32>
    %181 = arith.addf %159, %180 : vector<16x1xf32>
    %182 = tpu.iota {dimensions = array<i32: 0>} : vector<16x1xi32>
    %183 = vector.broadcast %0 : i32 to vector<16x1xi32>
    %184 = arith.addi %183, %182 : vector<16x1xi32>
    %c24_i32 = arith.constant 24 : i32
    %185 = vector.broadcast %c24_i32 : i32 to vector<16x1xi32>
    %186 = arith.cmpi slt, %184, %185 : vector<16x1xi32>
    %187 = arith.extui %186 : vector<16x1xi1> to vector<16x1xi32>
    %188 = arith.sitofp %187 : vector<16x1xi32> to vector<16x1xf32>
    %189 = arith.mulf %181, %188 : vector<16x1xf32>
    %cst_70 = arith.constant dense<0.000000e+00> : vector<1xf32>
    %190 = vector.multi_reduction <add>, %189, %cst_70 [0] : vector<16x1xf32> to vector<1xf32>
    %191 = vector.shape_cast %190 : vector<1xf32> to vector<1x1xf32>
    %192 = vector.shape_cast %191 : vector<1x1xf32> to vector<1x1x1xf32>
    %193 = vector.shape_cast %192 : vector<1x1x1xf32> to vector<1x1x1xf32>
    %194 = vector.broadcast %193 : vector<1x1x1xf32> to vector<1x8x128xf32>
    %c0_71 = arith.constant 0 : index
    %c0_72 = arith.constant 0 : index
    %c0_73 = arith.constant 0 : index
    %195 = vector.load %arg6[%c0_71, %c0_72, %c0_73] : memref<1x8x128xf32, #tpu.memory_space<vmem>>, vector<1x8x128xf32>
    tpu.vector_store %arg6[%c0_71, %c0_72, %c0_73], %194 {strides = array<i32>} : memref<1x8x128xf32, #tpu.memory_space<vmem>>, vector<1x8x128xf32>,
    return
  }
  func.func @transform_0(%arg0: i32) -> (i32, i32) {
    %c0_i32 = arith.constant 0 : i32
    %c0_i32_0 = arith.constant 0 : i32
    return %arg0, %c0_i32 : i32, i32
  }
  func.func @transform_1(%arg0: i32) -> (i32, i32) {
    %c0_i32 = arith.constant 0 : i32
    %c0_i32_0 = arith.constant 0 : i32
    return %arg0, %c0_i32 : i32, i32
  }
  func.func @transform_2(%arg0: i32) -> (i32, i32) {
    %c0_i32 = arith.constant 0 : i32
    %c0_i32_0 = arith.constant 0 : i32
    return %arg0, %c0_i32 : i32, i32
  }
  func.func @transform_3(%arg0: i32) -> (i32, i32) {
    %c0_i32 = arith.constant 0 : i32
    %c0_i32_0 = arith.constant 0 : i32
    %c0_i32_1 = arith.constant 0 : i32
    return %c0_i32, %c0_i32_0 : i32, i32
  }
  func.func @transform_4(%arg0: i32) -> (i32, i32) {
    %c0_i32 = arith.constant 0 : i32
    %c0_i32_0 = arith.constant 0 : i32
    %c0_i32_1 = arith.constant 0 : i32
    return %c0_i32, %c0_i32_0 : i32, i32
  }
  func.func @transform_5(%arg0: i32) -> (i32, i32, i32) {
    %c0_i32 = arith.constant 0 : i32
    %c0_i32_0 = arith.constant 0 : i32
    %c0_i32_1 = arith.constant 0 : i32
    return %arg0, %c0_i32, %c0_i32_0 : i32, i32, i32
  }
}

</mosaic_0001>

<llo_original>
// kernel: cbow_forward.1
$region0: #{cbow_forward.1}
  #allocation0 [shape = 'u32[]', space=smem, size = 0x4, offset = 0x4, fixed_abs, tag = 'smem constant byte address 0x4 - core index']
  #allocation1 [shape = 'u32[144,128]{1,0:T(1,128)}', space=vmem, size = 0x12000, scoped, tag = 'internal scratch']
  %s0 = inlined_call_operand.vmem [shape: s32[32,1], index: 0, kind: input, shape index: {}]
  %s1 = inlined_call_operand.vmem [shape: s32[32,4], index: 1, kind: input, shape index: {}]
  %s2 = inlined_call_operand.vmem [shape: s32[32,6], index: 2, kind: input, shape index: {}]
  %s3 = inlined_call_operand.vmem [shape: f32[128,128], index: 3, kind: input, shape index: {}]
  %s4 = inlined_call_operand.vmem [shape: f32[128,128], index: 4, kind: input, shape index: {}]
  %s5 = inlined_call_operand.vmem [shape: f32[2,8,128], index: 5, kind: output, shape index: {}]
  %s6 = sld [smem:[#allocation0]]
  $region53: #{cbow_forward.1} parent=0
    _
  %s8 = ssub.s32 1, %s6
  %s9 = scalar_select 0, %s8, %s6
  loop: start=0, step=1, limit=4
  $region2: #{cbow_forward.1} parent=0 // loop_pre_header
    _
  $region3: #{cbow_forward.1} parent=0 // loop_header
    %s11 = sphi 0, %s15
    %p12 = scmp.ge.s32.totalorder %s11, 4
    %s21 = sphi 0, %s23
    %s24 = sphi 0, %s21
    %s25 = sphi 0, %s24
    %s41 = sphi 0, %s25
    %s47 = sphi 0, %s49
    %s50 = sphi 0, %s47
    %s51 = sphi 0, %s50
    %s67 = sphi 0, %s51
    %s73 = sphi 0, %s75
    %s76 = sphi 0, %s73
    %s77 = sphi 0, %s76
    %s93 = sphi 0, %s77
    %s97 = sphi 0, %s97
    %s99 = sphi 0, %s97
    %s100 = sphi 0, %s99
    %s114 = sphi 0, %s100
    %s118 = sphi 0, %s118
    %s120 = sphi 0, %s118
    %s121 = sphi 0, %s120
    %s135 = sphi 0, %s121
    %s141 = sphi 0, %s143
    %s144 = sphi 0, %s141
    %s145 = sphi 0, %s144
    %s161 = sphi 0, %s145
  $region4: #{cbow_forward.1} parent=0 // loop_header_branch
    %14 = sbr.rel (%p12) target = $region8
  $region5: #{cbow_forward.1} parent=0 // loop_body
    %s16 = ssub.s32 %s11, 1
    %s17 = ssub.s32 %s11, 2
    %s18 = sadd.s32 %s11, 1
    %s19 = ssub.s32 %s11, %s18
    %p20 = scmp.eq.s32.totalorder %s19, 0
    %s22 = sadd.s32 %s21, 1
    %s23 = scalar_select %p20, %s21, %s22
    %p26 = pneg %p20
    %p27 = scmp.eq.s32.totalorder %s11, 1
    %p28 = por %p26, %p27
    %p29 = scmp.ne.s32.totalorder %s21, %s24
    %p30 = scmp.eq.s32.totalorder %s11, 0
    %p31 = por %p29, %p30
    %p32 = scmp.ne.s32.totalorder %s21, %s24
    %p33 = scmp.eq.s32.totalorder %s16, 1
    %p34 = por %p32, %p33
    %p35 = scmp.ne.s32.totalorder %s24, %s25
    %p36 = scmp.eq.s32.totalorder %s16, 0
    %p37 = por %p35, %p36
    %p38 = scmp.ne.s32.totalorder %s24, %s25
    %p39 = scmp.eq.s32.totalorder %s17, 1
    %p40 = por %p38, %p39
    %p42 = scmp.ne.s32.totalorder %s25, %s41
    %p43 = scmp.eq.s32.totalorder %s17, 0
    %p44 = por %p42, %p43
    %s45 = ssub.s32 %s11, %s18
    %p46 = scmp.eq.s32.totalorder %s45, 0
    %s48 = sadd.s32 %s47, 1
    %s49 = scalar_select %p46, %s47, %s48
    %p52 = pneg %p46
    %p53 = scmp.eq.s32.totalorder %s11, 1
    %p54 = por %p52, %p53
    %p55 = scmp.ne.s32.totalorder %s47, %s50
    %p56 = scmp.eq.s32.totalorder %s11, 0
    %p57 = por %p55, %p56
    %p58 = scmp.ne.s32.totalorder %s47, %s50
    %p59 = scmp.eq.s32.totalorder %s16, 1
    %p60 = por %p58, %p59
    %p61 = scmp.ne.s32.totalorder %s50, %s51
    %p62 = scmp.eq.s32.totalorder %s16, 0
    %p63 = por %p61, %p62
    %p64 = scmp.ne.s32.totalorder %s50, %s51
    %p65 = scmp.eq.s32.totalorder %s17, 1
    %p66 = por %p64, %p65
    %p68 = scmp.ne.s32.totalorder %s51, %s67
    %p69 = scmp.eq.s32.totalorder %s17, 0
    %p70 = por %p68, %p69
    %s71 = ssub.s32 %s11, %s18
    %p72 = scmp.eq.s32.totalorder %s71, 0
    %s74 = sadd.s32 %s73, 1
    %s75 = scalar_select %p72, %s73, %s74
    %p78 = pneg %p72
    %p79 = scmp.eq.s32.totalorder %s11, 1
    %p80 = por %p78, %p79
    %p81 = scmp.ne.s32.totalorder %s73, %s76
    %p82 = scmp.eq.s32.totalorder %s11, 0
    %p83 = por %p81, %p82
    %p84 = scmp.ne.s32.totalorder %s73, %s76
    %p85 = scmp.eq.s32.totalorder %s16, 1
    %p86 = por %p84, %p85
    %p87 = scmp.ne.s32.totalorder %s76, %s77
    %p88 = scmp.eq.s32.totalorder %s16, 0
    %p89 = por %p87, %p88
    %p90 = scmp.ne.s32.totalorder %s76, %s77
    %p91 = scmp.eq.s32.totalorder %s17, 1
    %p92 = por %p90, %p91
    %p94 = scmp.ne.s32.totalorder %s77, %s93
    %p95 = scmp.eq.s32.totalorder %s17, 0
    %p96 = por %p94, %p95
    %s98 = sadd.s32 %s97, 1
    %p101 = scmp.eq.s32.totalorder %s11, 1
    %p102 = scmp.ne.s32.totalorder %s97, %s99
    %p103 = scmp.eq.s32.totalorder %s11, 0
    %p104 = por %p102, %p103
    %p105 = scmp.ne.s32.totalorder %s97, %s99
    %p106 = scmp.eq.s32.totalorder %s16, 1
    %p107 = por %p105, %p106
    %p108 = scmp.ne.s32.totalorder %s99, %s100
    %p109 = scmp.eq.s32.totalorder %s16, 0
    %p110 = por %p108, %p109
    %p111 = scmp.ne.s32.totalorder %s99, %s100
    %p112 = scmp.eq.s32.totalorder %s17, 1
    %p113 = por %p111, %p112
    %p115 = scmp.ne.s32.totalorder %s100, %s114
    %p116 = scmp.eq.s32.totalorder %s17, 0
    %p117 = por %p115, %p116
    %s119 = sadd.s32 %s118, 1
    %p122 = scmp.eq.s32.totalorder %s11, 1
    %p123 = scmp.ne.s32.totalorder %s118, %s120
    %p124 = scmp.eq.s32.totalorder %s11, 0
    %p125 = por %p123, %p124
    %p126 = scmp.ne.s32.totalorder %s118, %s120
    %p127 = scmp.eq.s32.totalorder %s16, 1
    %p128 = por %p126, %p127
    %p129 = scmp.ne.s32.totalorder %s120, %s121
    %p130 = scmp.eq.s32.totalorder %s16, 0
    %p131 = por %p129, %p130
    %p132 = scmp.ne.s32.totalorder %s120, %s121
    %p133 = scmp.eq.s32.totalorder %s17, 1
    %p134 = por %p132, %p133
    %p136 = scmp.ne.s32.totalorder %s121, %s135
    %p137 = scmp.eq.s32.totalorder %s17, 0
    %p138 = por %p136, %p137
    %s139 = ssub.s32 %s11, %s18
    %p140 = scmp.eq.s32.totalorder %s139, 0
    %s142 = sadd.s32 %s141, 1
    %s143 = scalar_select %p140, %s141, %s142
    %p146 = pneg %p140
    %p147 = scmp.eq.s32.totalorder %s11, 1
    %p148 = por %p146, %p147
    %p149 = scmp.ne.s32.totalorder %s141, %s144
    %p150 = scmp.eq.s32.totalorder %s11, 0
    %p151 = por %p149, %p150
    %p152 = scmp.ne.s32.totalorder %s141, %s144
    %p153 = scmp.eq.s32.totalorder %s16, 1
    %p154 = por %p152, %p153
    %p155 = scmp.ne.s32.totalorder %s144, %s145
    %p156 = scmp.eq.s32.totalorder %s16, 0
    %p157 = por %p155, %p156
    %p158 = scmp.ne.s32.totalorder %s144, %s145
    %p159 = scmp.eq.s32.totalorder %s17, 1
    %p160 = por %p158, %p159
    %p162 = scmp.ne.s32.totalorder %s145, %s161
    %p163 = scmp.eq.s32.totalorder %s17, 0
    %p164 = por %p162, %p163
    %p165 = scmp.le.s32.totalorder 1, %s11
    %p166 = scmp.lt.s32.totalorder %s11, 3
    %p167 = pnand %p165, %p166
    %p168 = pneg %p167
    // Predicated region
    $region9: #{cbow_forward.1} parent=5 // pred_check
      _
    $region10: #{cbow_forward.1} parent=5 // pred_check_branch
      %170 = sbr.rel (%p167) target = $region12
    $region11: #{cbow_forward.1} parent=5 // pred_region
      %s171 = ssub.s32 %s11, 1
      // Predicated region
      $region13: #{cbow_forward.1} parent=11 // pred_check
        %p172 = pneg %p110
      $region14: #{cbow_forward.1} parent=11 // pred_check_branch
        %174 = sbr.rel (%p172) target = $region16
      $region15: #{cbow_forward.1} parent=11 // pred_region
        _
      $region16: #{cbow_forward.1} parent=11 // pred_fallthru
        _
      // Predicated region
      $region17: #{cbow_forward.1} parent=11 // pred_check
        %p175 = pneg %p131
      $region18: #{cbow_forward.1} parent=11 // pred_check_branch
        %177 = sbr.rel (%p175) target = $region20
      $region19: #{cbow_forward.1} parent=11 // pred_region
        _
      $region20: #{cbow_forward.1} parent=11 // pred_fallthru
        _
    $region12: #{cbow_forward.1} parent=5 // pred_fallthru
      _
    %p178 = scmp.lt.s32.totalorder %s11, 2
    // Predicated region
    $region21: #{cbow_forward.1} parent=5 // pred_check
      %p179 = pneg %p178
    $region22: #{cbow_forward.1} parent=5 // pred_check_branch
      %181 = sbr.rel (%p179) target = $region24
    $region23: #{cbow_forward.1} parent=5 // pred_region
      // Predicated region
      $region25: #{cbow_forward.1} parent=23 // pred_check
        %p182 = pneg %p31
      $region26: #{cbow_forward.1} parent=23 // pred_check_branch
        %184 = sbr.rel (%p182) target = $region28
      $region27: #{cbow_forward.1} parent=23 // pred_region
        %s185 = smul.u32 2, %s11
        %p186 = scmp.lt.s32.totalorder %s185, 3
        %s187 = scalar_select %p186, %s185, 3
        %s188 = smul.addr %s187, 8
        %s189 = scalar_lea.vmem %s0, %s188
        %s190 = smul.u32 2, %s11
      $region28: #{cbow_forward.1} parent=23 // pred_fallthru
        _
      // Predicated region
      $region29: #{cbow_forward.1} parent=23 // pred_check
        %p191 = pneg %p57
      $region30: #{cbow_forward.1} parent=23 // pred_check_branch
        %193 = sbr.rel (%p191) target = $region32
      $region31: #{cbow_forward.1} parent=23 // pred_region
        %s194 = smul.u32 2, %s11
        %p195 = scmp.lt.s32.totalorder %s194, 3
        %s196 = scalar_select %p195, %s194, 3
        %s197 = smul.addr %s196, 8
        %s198 = scalar_lea.vmem %s1, %s197
        %s199 = smul.u32 2, %s11
      $region32: #{cbow_forward.1} parent=23 // pred_fallthru
        _
      // Predicated region
      $region33: #{cbow_forward.1} parent=23 // pred_check
        %p200 = pneg %p83
      $region34: #{cbow_forward.1} parent=23 // pred_check_branch
        %202 = sbr.rel (%p200) target = $region36
      $region35: #{cbow_forward.1} parent=23 // pred_region
        %s203 = smul.u32 2, %s11
        %p204 = scmp.lt.s32.totalorder %s203, 3
        %s205 = scalar_select %p204, %s203, 3
        %s206 = smul.addr %s205, 8
        %s207 = scalar_lea.vmem %s2, %s206
        %s208 = smul.u32 2, %s11
      $region36: #{cbow_forward.1} parent=23 // pred_fallthru
        _
    $region24: #{cbow_forward.1} parent=5 // pred_fallthru
      _
    %p209 = scmp.le.s32.totalorder 1, %s11
    %p210 = scmp.lt.s32.totalorder %s11, 3
    %p211 = pnand %p209, %p210
    %p212 = pneg %p211
    // Predicated region
    $region37: #{cbow_forward.1} parent=5 // pred_check
      _
    $region38: #{cbow_forward.1} parent=5 // pred_check_branch
      %214 = sbr.rel (%p211) target = $region40
    $region39: #{cbow_forward.1} parent=5 // pred_region
      %s215 = ssub.s32 %s11, 1
      %s216 = smul.u32 2, %s16
      %p217 = scmp.lt.s32.totalorder %s216, 3
      %s218 = scalar_select %p217, %s216, 3
      %s219 = smul.addr %s218, 8
      %s220 = scalar_lea.vmem %s0, %s219
      %p221 = pneg %p37
      %p222 = pneg %p34
      %s223 = smul.u32 2, %s16
      %p224 = scmp.lt.s32.totalorder %s223, 3
      %s225 = scalar_select %p224, %s223, 3
      %s226 = smul.addr %s225, 8
      %s227 = scalar_lea.vmem %s1, %s226
      %p228 = pneg %p63
      %p229 = pneg %p60
      %s230 = smul.u32 2, %s16
      %p231 = scmp.lt.s32.totalorder %s230, 3
      %s232 = scalar_select %p231, %s230, 3
      %s233 = smul.addr %s232, 8
      %s234 = scalar_lea.vmem %s2, %s233
      %p235 = pneg %p89
      %p236 = pneg %p86
      %p237 = pneg %p110
      %p238 = pneg %p107
      %p239 = pneg %p131
      %p240 = pneg %p128
      %p241 = pneg %p157
      %p242 = pneg %p154
      %p243 = scmp.lt.s32.totalorder %s16, 1
      %s244 = scalar_select %p243, %s16, 1
      %s245 = smul.addr %s244, 8
      %s246 = scalar_lea.vmem %s5, %s245
      %s247 = smul.u32 2, %s16
      %p248 = scmp.lt.s32.totalorder %s247, 3
      %s249 = scalar_select %p248, %s247, 3
      %s250 = smul.addr %s249, 8
      %s251 = scalar_lea.vmem %s0, %s250
      %s252 = smul.u32 2, %s16
      %s253 = smul.u32 2, %s16
      %p254 = scmp.lt.s32.totalorder %s253, 3
      %s255 = scalar_select %p254, %s253, 3
      %s256 = smul.addr %s255, 8
      %s257 = scalar_lea.vmem %s1, %s256
      %s258 = smul.u32 2, %s16
      %s259 = smul.u32 2, %s16
      %p260 = scmp.lt.s32.totalorder %s259, 3
      %s261 = scalar_select %p260, %s259, 3
      %s262 = smul.addr %s261, 8
      %s263 = scalar_lea.vmem %s2, %s262
      %s264 = smul.u32 2, %s16
      %p265 = scmp.lt.s32.totalorder %s16, 1
      %s266 = scalar_select %p265, %s16, 1
      %s267 = smul.addr %s266, 8
      %s268 = scalar_lea.vmem %s5, %s267
      %s269 = smul.u32 %s16, 16
      %v270 = vlaneseq
      %v271 = vand.u32 %v270, 127
      %v272 = vld [vmem:[%s257] sm:$0xff]
      %v273 = vld [vmem:[%s257 + $0x8] sm:$0xff]
      %274 = vset.pattern.permute.xlu0 0
      %275 = vperm.xlu0 %274, %v272
      %v276 = vpop.permute.xlu0 %275
      %277 = vset.pattern.permute.xlu0 0
      %278 = vperm.xlu0 %277, %v273
      %v279 = vpop.permute.xlu0 %278
      %vm280 = vcmp.eq.s32.totalorder %v276, %v271
      %vm281 = vcmp.eq.s32.totalorder %v279, %v271
      %v282 = vsel %vm280, 1, 0
      %v283 = vsel %vm281, 1, 0
      %v284 = vcvt.s32.f32 %v282
      %v285 = vcvt.s32.f32 %v283
      %v286 = vadd.f32 %v284, 0.0
      %v287 = vadd.f32 %v285, 0.0
      %288 = vset.pattern.permute.xlu0 1
      %289 = vperm.xlu0 %288, %v272
      %v290 = vpop.permute.xlu0 %289
      %291 = vset.pattern.permute.xlu0 1
      %292 = vperm.xlu0 %291, %v273
      %v293 = vpop.permute.xlu0 %292
      %vm294 = vcmp.eq.s32.totalorder %v290, %v271
      %vm295 = vcmp.eq.s32.totalorder %v293, %v271
      %v296 = vsel %vm294, 1, 0
      %v297 = vsel %vm295, 1, 0
      %v298 = vcvt.s32.f32 %v296
      %v299 = vcvt.s32.f32 %v297
      %v300 = vadd.f32 %v286, %v298
      %v301 = vadd.f32 %v287, %v299
      %302 = vset.pattern.permute.xlu0 2
      %303 = vperm.xlu0 %302, %v272
      %v304 = vpop.permute.xlu0 %303
      %305 = vset.pattern.permute.xlu0 2
      %306 = vperm.xlu0 %305, %v273
      %v307 = vpop.permute.xlu0 %306
      %vm308 = vcmp.eq.s32.totalorder %v304, %v271
      %vm309 = vcmp.eq.s32.totalorder %v307, %v271
      %v310 = vsel %vm308, 1, 0
      %v311 = vsel %vm309, 1, 0
      %v312 = vcvt.s32.f32 %v310
      %v313 = vcvt.s32.f32 %v311
      %v314 = vadd.f32 %v300, %v312
      %v315 = vadd.f32 %v301, %v313
      %316 = vset.pattern.permute.xlu0 3
      %317 = vperm.xlu0 %316, %v272
      %v318 = vpop.permute.xlu0 %317
      %319 = vset.pattern.permute.xlu0 3
      %320 = vperm.xlu0 %319, %v273
      %v321 = vpop.permute.xlu0 %320
      %vm322 = vcmp.eq.s32.totalorder %v318, %v271
      %vm323 = vcmp.eq.s32.totalorder %v321, %v271
      %v324 = vsel %vm322, 1, 0
      %v325 = vsel %vm323, 1, 0
      %v326 = vcvt.s32.f32 %v324
      %v327 = vcvt.s32.f32 %v325
      %v328 = vadd.f32 %v314, %v326
      %v329 = vadd.f32 %v315, %v327
      %v330 = vld [vmem:[%s3] sm:$0xff]
      %v331 = vld [vmem:[%s3 + $0x8] sm:$0xff]
      %v332 = vld [vmem:[%s3 + $0x10] sm:$0xff]
      %v333 = vld [vmem:[%s3 + $0x18] sm:$0xff]
      %v334 = vld [vmem:[%s3 + $0x20] sm:$0xff]
      %v335 = vld [vmem:[%s3 + $0x28] sm:$0xff]
      %v336 = vld [vmem:[%s3 + $0x30] sm:$0xff]
      %v337 = vld [vmem:[%s3 + $0x38] sm:$0xff]
      %v338 = vld [vmem:[%s3 + $0x40] sm:$0xff]
      %v339 = vld [vmem:[%s3 + $0x48] sm:$0xff]
      %v340 = vld [vmem:[%s3 + $0x50] sm:$0xff]
      %v341 = vld [vmem:[%s3 + $0x58] sm:$0xff]
      %v342 = vld [vmem:[%s3 + $0x60] sm:$0xff]
      %v343 = vld [vmem:[%s3 + $0x68] sm:$0xff]
      %v344 = vld [vmem:[%s3 + $0x70] sm:$0xff]
      %v345 = vld [vmem:[%s3 + $0x78] sm:$0xff]
      %346 = vmatprep.subr.mxu0 0.0
      %v347 = vand.u32 %v330, 4294901760
      %348 = vmatpush1.msra.mxu0 %v347
      %349 = vmatprep.subr.mxu0 0.0
      %v350 = vand.u32 %v331, 4294901760
      %351 = vmatpush1.msra.mxu0 %v350
      %352 = vmatprep.subr.mxu0 0.0
      %v353 = vand.u32 %v332, 4294901760
      %354 = vmatpush1.msra.mxu0 %v353
      %355 = vmatprep.subr.mxu0 0.0
      %v356 = vand.u32 %v333, 4294901760
      %357 = vmatpush1.msra.mxu0 %v356
      %358 = vmatprep.subr.mxu0 0.0
      %v359 = vand.u32 %v334, 4294901760
      %360 = vmatpush1.msra.mxu0 %v359
      %361 = vmatprep.subr.mxu0 0.0
      %v362 = vand.u32 %v335, 4294901760
      %363 = vmatpush1.msra.mxu0 %v362
      %364 = vmatprep.subr.mxu0 0.0
      %v365 = vand.u32 %v336, 4294901760
      %366 = vmatpush1.msra.mxu0 %v365
      %367 = vmatprep.subr.mxu0 0.0
      %v368 = vand.u32 %v337, 4294901760
      %369 = vmatpush1.msra.mxu0 %v368
      %370 = vmatprep.subr.mxu0 0.0
      %v371 = vand.u32 %v338, 4294901760
      %372 = vmatpush1.msra.mxu0 %v371
      %373 = vmatprep.subr.mxu0 0.0
      %v374 = vand.u32 %v339, 4294901760
      %375 = vmatpush1.msra.mxu0 %v374
      %376 = vmatprep.subr.mxu0 0.0
      %v377 = vand.u32 %v340, 4294901760
      %378 = vmatpush1.msra.mxu0 %v377
      %379 = vmatprep.subr.mxu0 0.0
      %v380 = vand.u32 %v341, 4294901760
      %381 = vmatpush1.msra.mxu0 %v380
      %382 = vmatprep.subr.mxu0 0.0
      %v383 = vand.u32 %v342, 4294901760
      %384 = vmatpush1.msra.mxu0 %v383
      %385 = vmatprep.subr.mxu0 0.0
      %v386 = vand.u32 %v343, 4294901760
      %387 = vmatpush1.msra.mxu0 %v386
      %388 = vmatprep.subr.mxu0 0.0
      %v389 = vand.u32 %v344, 4294901760
      %390 = vmatpush1.msra.mxu0 %v389
      %391 = vmatprep.subr.mxu0 0.0
      %v392 = vand.u32 %v345, 4294901760
      %393 = vmatpush1.msra.mxu0 %v392
      %394 = vmatprep.subr.mxu0 0.0
      %395 = vmatpush1.msra.mxu0 0.0
      %396 = vmatprep.subr.mxu0 0.0
      %397 = vmatpush1.msra.mxu0 0.0
      %398 = vmatprep.subr.mxu0 0.0
      %399 = vmatpush1.msra.mxu0 0.0
      %400 = vmatprep.subr.mxu0 0.0
      %401 = vmatpush1.msra.mxu0 0.0
      %402 = vmatprep.subr.mxu0 0.0
      %403 = vmatpush1.msra.mxu0 0.0
      %404 = vmatprep.subr.mxu0 0.0
      %405 = vmatpush1.msra.mxu0 0.0
      %406 = vmatprep.subr.mxu0 0.0
      %407 = vmatpush1.msra.mxu0 0.0
      %408 = vmatprep.subr.mxu0 0.0
      %409 = vmatpush1.msra.mxu0 0.0
      %410 = vmatprep.subr.mxu0 0.0
      %411 = vmatpush1.msra.mxu0 0.0
      %412 = vmatprep.subr.mxu0 0.0
      %413 = vmatpush1.msra.mxu0 0.0
      %414 = vmatprep.subr.mxu0 0.0
      %415 = vmatpush1.msra.mxu0 0.0
      %416 = vmatprep.subr.mxu0 0.0
      %417 = vmatpush1.msra.mxu0 0.0
      %418 = vmatprep.subr.mxu0 0.0
      %419 = vmatpush1.msra.mxu0 0.0
      %420 = vmatprep.subr.mxu0 0.0
      %421 = vmatpush1.msra.mxu0 0.0
      %422 = vmatprep.subr.mxu0 0.0
      %423 = vmatpush1.msra.mxu0 0.0
      %424 = vmatprep.subr.mxu0 0.0
      %425 = vmatpush1.msra.mxu0 0.0
      %426 = vmatprep.mubr.f32.mxu0 0.0
      %v427 = vand.u32 %v328, 4294901760
      %v428 = vsub.f32 %v328, %v427
      %v429 = vand.u32 %v428, 4294901760
      %v430 = vsub.f32 %v428, %v429
      %v431 = vand.u32 %v430, 4294901760
      %432 = vmatmul.mubr.f32.gmra.mrb[0].mxu0 %v431
      %v433 = vpop.f32.mrb[0].mxu0
      %v434 = vadd.f32 0.0, %v433
      %v435 = vpop.f32.mrb[0].mxu0
      %436 = vmatprep.mubr.f32.mxu0 0.0
      %v437 = vand.u32 %v329, 4294901760
      %v438 = vsub.f32 %v329, %v437
      %v439 = vand.u32 %v438, 4294901760
      %v440 = vsub.f32 %v438, %v439
      %v441 = vand.u32 %v440, 4294901760
      %442 = vmatmul.mubr.f32.gmra.mrb[0].mxu0 %v441
      %v443 = vpop.f32.mrb[0].mxu0
      %v444 = vadd.f32 0.0, %v443
      %v445 = vpop.f32.mrb[0].mxu0
      %446 = vdwg.mxu0
      %447 = vmatprep.subr.mxu0 0.0
      %v448 = vand.u32 %v330, 4294901760
      %v449 = vsub.f32 %v330, %v448
      %v450 = vand.u32 %v449, 4294901760
      %v451 = vsub.f32 %v449, %v450
      %v452 = vand.u32 %v451, 4294901760
      %453 = vmatpush1.msra.mxu0 %v452
      %454 = vmatprep.subr.mxu0 0.0
      %v455 = vand.u32 %v331, 4294901760
      %v456 = vsub.f32 %v331, %v455
      %v457 = vand.u32 %v456, 4294901760
      %v458 = vsub.f32 %v456, %v457
      %v459 = vand.u32 %v458, 4294901760
      %460 = vmatpush1.msra.mxu0 %v459
      %461 = vmatprep.subr.mxu0 0.0
      %v462 = vand.u32 %v332, 4294901760
      %v463 = vsub.f32 %v332, %v462
      %v464 = vand.u32 %v463, 4294901760
      %v465 = vsub.f32 %v463, %v464
      %v466 = vand.u32 %v465, 4294901760
      %467 = vmatpush1.msra.mxu0 %v466
      %468 = vmatprep.subr.mxu0 0.0
      %v469 = vand.u32 %v333, 4294901760
      %v470 = vsub.f32 %v333, %v469
      %v471 = vand.u32 %v470, 4294901760
      %v472 = vsub.f32 %v470, %v471
      %v473 = vand.u32 %v472, 4294901760
      %474 = vmatpush1.msra.mxu0 %v473
      %475 = vmatprep.subr.mxu0 0.0
      %v476 = vand.u32 %v334, 4294901760
      %v477 = vsub.f32 %v334, %v476
      %v478 = vand.u32 %v477, 4294901760
      %v479 = vsub.f32 %v477, %v478
      %v480 = vand.u32 %v479, 4294901760
      %481 = vmatpush1.msra.mxu0 %v480
      %482 = vmatprep.subr.mxu0 0.0
      %v483 = vand.u32 %v335, 4294901760
      %v484 = vsub.f32 %v335, %v483
      %v485 = vand.u32 %v484, 4294901760
      %v486 = vsub.f32 %v484, %v485
      %v487 = vand.u32 %v486, 4294901760
      %488 = vmatpush1.msra.mxu0 %v487
      %489 = vmatprep.subr.mxu0 0.0
      %v490 = vand.u32 %v336, 4294901760
      %v491 = vsub.f32 %v336, %v490
      %v492 = vand.u32 %v491, 4294901760
      %v493 = vsub.f32 %v491, %v492
      %v494 = vand.u32 %v493, 4294901760
      %495 = vmatpush1.msra.mxu0 %v494
      %496 = vmatprep.subr.mxu0 0.0
      %v497 = vand.u32 %v337, 4294901760
      %v498 = vsub.f32 %v337, %v497
      %v499 = vand.u32 %v498, 4294901760
      %v500 = vsub.f32 %v498, %v499
      %v501 = vand.u32 %v500, 4294901760
      %502 = vmatpush1.msra.mxu0 %v501
      %503 = vmatprep.subr.mxu0 0.0
      %v504 = vand.u32 %v338, 4294901760
      %v505 = vsub.f32 %v338, %v504
      %v506 = vand.u32 %v505, 4294901760
      %v507 = vsub.f32 %v505, %v506
      %v508 = vand.u32 %v507, 4294901760
      %509 = vmatpush1.msra.mxu0 %v508
      %510 = vmatprep.subr.mxu0 0.0
      %v511 = vand.u32 %v339, 4294901760
      %v512 = vsub.f32 %v339, %v511
      %v513 = vand.u32 %v512, 4294901760
      %v514 = vsub.f32 %v512, %v513
      %v515 = vand.u32 %v514, 4294901760
      %516 = vmatpush1.msra.mxu0 %v515
      %517 = vmatprep.subr.mxu0 0.0
      %v518 = vand.u32 %v340, 4294901760
      %v519 = vsub.f32 %v340, %v518
      %v520 = vand.u32 %v519, 4294901760
      %v521 = vsub.f32 %v519, %v520
      %v522 = vand.u32 %v521, 4294901760
      %523 = vmatpush1.msra.mxu0 %v522
      %524 = vmatprep.subr.mxu0 0.0
      %v525 = vand.u32 %v341, 4294901760
      %v526 = vsub.f32 %v341, %v525
      %v527 = vand.u32 %v526, 4294901760
      %v528 = vsub.f32 %v526, %v527
      %v529 = vand.u32 %v528, 4294901760
      %530 = vmatpush1.msra.mxu0 %v529
      %531 = vmatprep.subr.mxu0 0.0
      %v532 = vand.u32 %v342, 4294901760
      %v533 = vsub.f32 %v342, %v532
      %v534 = vand.u32 %v533, 4294901760
      %v535 = vsub.f32 %v533, %v534
      %v536 = vand.u32 %v535, 4294901760
      %537 = vmatpush1.msra.mxu0 %v536
      %538 = vmatprep.subr.mxu0 0.0
      %v539 = vand.u32 %v343, 4294901760
      %v540 = vsub.f32 %v343, %v539
      %v541 = vand.u32 %v540, 4294901760
      %v542 = vsub.f32 %v540, %v541
      %v543 = vand.u32 %v542, 4294901760
      %544 = vmatpush1.msra.mxu0 %v543
      %545 = vmatprep.subr.mxu0 0.0
      %v546 = vand.u32 %v344, 4294901760
      %v547 = vsub.f32 %v344, %v546
      %v548 = vand.u32 %v547, 4294901760
      %v549 = vsub.f32 %v547, %v548
      %v550 = vand.u32 %v549, 4294901760
      %551 = vmatpush1.msra.mxu0 %v550
      %552 = vmatprep.subr.mxu0 0.0
      %v553 = vand.u32 %v345, 4294901760
      %v554 = vsub.f32 %v345, %v553
      %v555 = vand.u32 %v554, 4294901760
      %v556 = vsub.f32 %v554, %v555
      %v557 = vand.u32 %v556, 4294901760
      %558 = vmatpush1.msra.mxu0 %v557
      %559 = vmatprep.subr.mxu0 0.0
      %560 = vmatpush1.msra.mxu0 0.0
      %561 = vmatprep.subr.mxu0 0.0
      %562 = vmatpush1.msra.mxu0 0.0
      %563 = vmatprep.subr.mxu0 0.0
      %564 = vmatpush1.msra.mxu0 0.0
      %565 = vmatprep.subr.mxu0 0.0
      %566 = vmatpush1.msra.mxu0 0.0
      %567 = vmatprep.subr.mxu0 0.0
      %568 = vmatpush1.msra.mxu0 0.0
      %569 = vmatprep.subr.mxu0 0.0
      %570 = vmatpush1.msra.mxu0 0.0
      %571 = vmatprep.subr.mxu0 0.0
      %572 = vmatpush1.msra.mxu0 0.0
      %573 = vmatprep.subr.mxu0 0.0
      %574 = vmatpush1.msra.mxu0 0.0
      %575 = vmatprep.subr.mxu0 0.0
      %576 = vmatpush1.msra.mxu0 0.0
      %577 = vmatprep.subr.mxu0 0.0
      %578 = vmatpush1.msra.mxu0 0.0
      %579 = vmatprep.subr.mxu0 0.0
      %580 = vmatpush1.msra.mxu0 0.0
      %581 = vmatprep.subr.mxu0 0.0
      %582 = vmatpush1.msra.mxu0 0.0
      %583 = vmatprep.subr.mxu0 0.0
      %584 = vmatpush1.msra.mxu0 0.0
      %585 = vmatprep.subr.mxu0 0.0
      %586 = vmatpush1.msra.mxu0 0.0
      %587 = vmatprep.subr.mxu0 0.0
      %588 = vmatpush1.msra.mxu0 0.0
      %589 = vmatprep.subr.mxu0 0.0
      %590 = vmatpush1.msra.mxu0 0.0
      %591 = vmatprep.mubr.f32.mxu0 0.0
      %v592 = vand.u32 %v328, 4294901760
      %593 = vmatmul.mubr.f32.gmra.mrb[0].mxu0 %v592
      %v594 = vpop.f32.mrb[0].mxu0
      %v595 = vadd.f32 %v434, %v594
      %v596 = vpop.f32.mrb[0].mxu0
      %597 = vmatprep.mubr.f32.mxu0 0.0
      %v598 = vand.u32 %v329, 4294901760
      %599 = vmatmul.mubr.f32.gmra.mrb[0].mxu0 %v598
      %v600 = vpop.f32.mrb[0].mxu0
      %v601 = vadd.f32 %v444, %v600
      %v602 = vpop.f32.mrb[0].mxu0
      %603 = vdwg.mxu0
      %604 = vmatprep.subr.mxu0 0.0
      %v605 = vand.u32 %v330, 4294901760
      %v606 = vsub.f32 %v330, %v605
      %607 = vmatpush1.msra.mxu0 %v606
      %608 = vmatprep.subr.mxu0 0.0
      %v609 = vand.u32 %v331, 4294901760
      %v610 = vsub.f32 %v331, %v609
      %611 = vmatpush1.msra.mxu0 %v610
      %612 = vmatprep.subr.mxu0 0.0
      %v613 = vand.u32 %v332, 4294901760
      %v614 = vsub.f32 %v332, %v613
      %615 = vmatpush1.msra.mxu0 %v614
      %616 = vmatprep.subr.mxu0 0.0
      %v617 = vand.u32 %v333, 4294901760
      %v618 = vsub.f32 %v333, %v617
      %619 = vmatpush1.msra.mxu0 %v618
      %620 = vmatprep.subr.mxu0 0.0
      %v621 = vand.u32 %v334, 4294901760
      %v622 = vsub.f32 %v334, %v621
      %623 = vmatpush1.msra.mxu0 %v622
      %624 = vmatprep.subr.mxu0 0.0
      %v625 = vand.u32 %v335, 4294901760
      %v626 = vsub.f32 %v335, %v625
      %627 = vmatpush1.msra.mxu0 %v626
      %628 = vmatprep.subr.mxu0 0.0
      %v629 = vand.u32 %v336, 4294901760
      %v630 = vsub.f32 %v336, %v629
      %631 = vmatpush1.msra.mxu0 %v630
      %632 = vmatprep.subr.mxu0 0.0
      %v633 = vand.u32 %v337, 4294901760
      %v634 = vsub.f32 %v337, %v633
      %635 = vmatpush1.msra.mxu0 %v634
      %636 = vmatprep.subr.mxu0 0.0
      %v637 = vand.u32 %v338, 4294901760
      %v638 = vsub.f32 %v338, %v637
      %639 = vmatpush1.msra.mxu0 %v638
      %640 = vmatprep.subr.mxu0 0.0
      %v641 = vand.u32 %v339, 4294901760
      %v642 = vsub.f32 %v339, %v641
      %643 = vmatpush1.msra.mxu0 %v642
      %644 = vmatprep.subr.mxu0 0.0
      %v645 = vand.u32 %v340, 4294901760
      %v646 = vsub.f32 %v340, %v645
      %647 = vmatpush1.msra.mxu0 %v646
      %648 = vmatprep.subr.mxu0 0.0
      %v649 = vand.u32 %v341, 4294901760
      %v650 = vsub.f32 %v341, %v649
      %651 = vmatpush1.msra.mxu0 %v650
      %652 = vmatprep.subr.mxu0 0.0
      %v653 = vand.u32 %v342, 4294901760
      %v654 = vsub.f32 %v342, %v653
      %655 = vmatpush1.msra.mxu0 %v654
      %656 = vmatprep.subr.mxu0 0.0
      %v657 = vand.u32 %v343, 4294901760
      %v658 = vsub.f32 %v343, %v657
      %659 = vmatpush1.msra.mxu0 %v658
      %660 = vmatprep.subr.mxu0 0.0
      %v661 = vand.u32 %v344, 4294901760
      %v662 = vsub.f32 %v344, %v661
      %663 = vmatpush1.msra.mxu0 %v662
      %664 = vmatprep.subr.mxu0 0.0
      %v665 = vand.u32 %v345, 4294901760
      %v666 = vsub.f32 %v345, %v665
      %667 = vmatpush1.msra.mxu0 %v666
      %668 = vmatprep.subr.mxu0 0.0
      %669 = vmatpush1.msra.mxu0 0.0
      %670 = vmatprep.subr.mxu0 0.0
      %671 = vmatpush1.msra.mxu0 0.0
      %672 = vmatprep.subr.mxu0 0.0
      %673 = vmatpush1.msra.mxu0 0.0
      %674 = vmatprep.subr.mxu0 0.0
      %675 = vmatpush1.msra.mxu0 0.0
      %676 = vmatprep.subr.mxu0 0.0
      %677 = vmatpush1.msra.mxu0 0.0
      %678 = vmatprep.subr.mxu0 0.0
      %679 = vmatpush1.msra.mxu0 0.0
      %680 = vmatprep.subr.mxu0 0.0
      %681 = vmatpush1.msra.mxu0 0.0
      %682 = vmatprep.subr.mxu0 0.0
      %683 = vmatpush1.msra.mxu0 0.0
      %684 = vmatprep.subr.mxu0 0.0
      %685 = vmatpush1.msra.mxu0 0.0
      %686 = vmatprep.subr.mxu0 0.0
      %687 = vmatpush1.msra.mxu0 0.0
      %688 = vmatprep.subr.mxu0 0.0
      %689 = vmatpush1.msra.mxu0 0.0
      %690 = vmatprep.subr.mxu0 0.0
      %691 = vmatpush1.msra.mxu0 0.0
      %692 = vmatprep.subr.mxu0 0.0
      %693 = vmatpush1.msra.mxu0 0.0
      %694 = vmatprep.subr.mxu0 0.0
      %695 = vmatpush1.msra.mxu0 0.0
      %696 = vmatprep.subr.mxu0 0.0
      %697 = vmatpush1.msra.mxu0 0.0
      %698 = vmatprep.subr.mxu0 0.0
      %699 = vmatpush1.msra.mxu0 0.0
      %700 = vmatprep.mubr.f32.mxu0 0.0
      %v701 = vand.u32 %v328, 4294901760
      %v702 = vsub.f32 %v328, %v701
      %703 = vmatmul.mubr.f32.gmra.mrb[0].mxu0 %v702
      %v704 = vpop.f32.mrb[0].mxu0
      %v705 = vadd.f32 %v595, %v704
      %v706 = vpop.f32.mrb[0].mxu0
      %707 = vmatprep.mubr.f32.mxu0 0.0
      %v708 = vand.u32 %v329, 4294901760
      %v709 = vsub.f32 %v329, %v708
      %710 = vmatmul.mubr.f32.gmra.mrb[0].mxu0 %v709
      %v711 = vpop.f32.mrb[0].mxu0
      %v712 = vadd.f32 %v601, %v711
      %v713 = vpop.f32.mrb[0].mxu0
      %714 = vdwg.mxu0
      %715 = vmatprep.subr.mxu0 0.0
      %v716 = vand.u32 %v330, 4294901760
      %717 = vmatpush1.msra.mxu0 %v716
      %718 = vmatprep.subr.mxu0 0.0
      %v719 = vand.u32 %v331, 4294901760
      %720 = vmatpush1.msra.mxu0 %v719
      %721 = vmatprep.subr.mxu0 0.0
      %v722 = vand.u32 %v332, 4294901760
      %723 = vmatpush1.msra.mxu0 %v722
      %724 = vmatprep.subr.mxu0 0.0
      %v725 = vand.u32 %v333, 4294901760
      %726 = vmatpush1.msra.mxu0 %v725
      %727 = vmatprep.subr.mxu0 0.0
      %v728 = vand.u32 %v334, 4294901760
      %729 = vmatpush1.msra.mxu0 %v728
      %730 = vmatprep.subr.mxu0 0.0
      %v731 = vand.u32 %v335, 4294901760
      %732 = vmatpush1.msra.mxu0 %v731
      %733 = vmatprep.subr.mxu0 0.0
      %v734 = vand.u32 %v336, 4294901760
      %735 = vmatpush1.msra.mxu0 %v734
      %736 = vmatprep.subr.mxu0 0.0
      %v737 = vand.u32 %v337, 4294901760
      %738 = vmatpush1.msra.mxu0 %v737
      %739 = vmatprep.subr.mxu0 0.0
      %v740 = vand.u32 %v338, 4294901760
      %741 = vmatpush1.msra.mxu0 %v740
      %742 = vmatprep.subr.mxu0 0.0
      %v743 = vand.u32 %v339, 4294901760
      %744 = vmatpush1.msra.mxu0 %v743
      %745 = vmatprep.subr.mxu0 0.0
      %v746 = vand.u32 %v340, 4294901760
      %747 = vmatpush1.msra.mxu0 %v746
      %748 = vmatprep.subr.mxu0 0.0
      %v749 = vand.u32 %v341, 4294901760
      %750 = vmatpush1.msra.mxu0 %v749
      %751 = vmatprep.subr.mxu0 0.0
      %v752 = vand.u32 %v342, 4294901760
      %753 = vmatpush1.msra.mxu0 %v752
      %754 = vmatprep.subr.mxu0 0.0
      %v755 = vand.u32 %v343, 4294901760
      %756 = vmatpush1.msra.mxu0 %v755
      %757 = vmatprep.subr.mxu0 0.0
      %v758 = vand.u32 %v344, 4294901760
      %759 = vmatpush1.msra.mxu0 %v758
      %760 = vmatprep.subr.mxu0 0.0
      %v761 = vand.u32 %v345, 4294901760
      %762 = vmatpush1.msra.mxu0 %v761
      %763 = vmatprep.subr.mxu0 0.0
      %764 = vmatpush1.msra.mxu0 0.0
      %765 = vmatprep.subr.mxu0 0.0
      %766 = vmatpush1.msra.mxu0 0.0
      %767 = vmatprep.subr.mxu0 0.0
      %768 = vmatpush1.msra.mxu0 0.0
      %769 = vmatprep.subr.mxu0 0.0
      %770 = vmatpush1.msra.mxu0 0.0
      %771 = vmatprep.subr.mxu0 0.0
      %772 = vmatpush1.msra.mxu0 0.0
      %773 = vmatprep.subr.mxu0 0.0
      %774 = vmatpush1.msra.mxu0 0.0
      %775 = vmatprep.subr.mxu0 0.0
      %776 = vmatpush1.msra.mxu0 0.0
      %777 = vmatprep.subr.mxu0 0.0
      %778 = vmatpush1.msra.mxu0 0.0
      %779 = vmatprep.subr.mxu0 0.0
      %780 = vmatpush1.msra.mxu0 0.0
      %781 = vmatprep.subr.mxu0 0.0
      %782 = vmatpush1.msra.mxu0 0.0
      %783 = vmatprep.subr.mxu0 0.0
      %784 = vmatpush1.msra.mxu0 0.0
      %785 = vmatprep.subr.mxu0 0.0
      %786 = vmatpush1.msra.mxu0 0.0
      %787 = vmatprep.subr.mxu0 0.0
      %788 = vmatpush1.msra.mxu0 0.0
      %789 = vmatprep.subr.mxu0 0.0
      %790 = vmatpush1.msra.mxu0 0.0
      %791 = vmatprep.subr.mxu0 0.0
      %792 = vmatpush1.msra.mxu0 0.0
      %793 = vmatprep.subr.mxu0 0.0
      %794 = vmatpush1.msra.mxu0 0.0
      %795 = vmatprep.mubr.f32.mxu0 0.0
      %v796 = vand.u32 %v328, 4294901760
      %v797 = vsub.f32 %v328, %v796
      %v798 = vand.u32 %v797, 4294901760
      %799 = vmatmul.mubr.f32.gmra.mrb[0].mxu0 %v798
      %v800 = vpop.f32.mrb[0].mxu0
      %v801 = vadd.f32 %v705, %v800
      %v802 = vpop.f32.mrb[0].mxu0
      %803 = vmatprep.mubr.f32.mxu0 0.0
      %v804 = vand.u32 %v329, 4294901760
      %v805 = vsub.f32 %v329, %v804
      %v806 = vand.u32 %v805, 4294901760
      %807 = vmatmul.mubr.f32.gmra.mrb[0].mxu0 %v806
      %v808 = vpop.f32.mrb[0].mxu0
      %v809 = vadd.f32 %v712, %v808
      %v810 = vpop.f32.mrb[0].mxu0
      %811 = vdwg.mxu0
      %812 = vmatprep.subr.mxu0 0.0
      %v813 = vand.u32 %v330, 4294901760
      %v814 = vsub.f32 %v330, %v813
      %v815 = vand.u32 %v814, 4294901760
      %816 = vmatpush1.msra.mxu0 %v815
      %817 = vmatprep.subr.mxu0 0.0
      %v818 = vand.u32 %v331, 4294901760
      %v819 = vsub.f32 %v331, %v818
      %v820 = vand.u32 %v819, 4294901760
      %821 = vmatpush1.msra.mxu0 %v820
      %822 = vmatprep.subr.mxu0 0.0
      %v823 = vand.u32 %v332, 4294901760
      %v824 = vsub.f32 %v332, %v823
      %v825 = vand.u32 %v824, 4294901760
      %826 = vmatpush1.msra.mxu0 %v825
      %827 = vmatprep.subr.mxu0 0.0
      %v828 = vand.u32 %v333, 4294901760
      %v829 = vsub.f32 %v333, %v828
      %v830 = vand.u32 %v829, 4294901760
      %831 = vmatpush1.msra.mxu0 %v830
      %832 = vmatprep.subr.mxu0 0.0
      %v833 = vand.u32 %v334, 4294901760
      %v834 = vsub.f32 %v334, %v833
      %v835 = vand.u32 %v834, 4294901760
      %836 = vmatpush1.msra.mxu0 %v835
      %837 = vmatprep.subr.mxu0 0.0
      %v838 = vand.u32 %v335, 4294901760
      %v839 = vsub.f32 %v335, %v838
      %v840 = vand.u32 %v839, 4294901760
      %841 = vmatpush1.msra.mxu0 %v840
      %842 = vmatprep.subr.mxu0 0.0
      %v843 = vand.u32 %v336, 4294901760
      %v844 = vsub.f32 %v336, %v843
      %v845 = vand.u32 %v844, 4294901760
      %846 = vmatpush1.msra.mxu0 %v845
      %847 = vmatprep.subr.mxu0 0.0
      %v848 = vand.u32 %v337, 4294901760
      %v849 = vsub.f32 %v337, %v848
      %v850 = vand.u32 %v849, 4294901760
      %851 = vmatpush1.msra.mxu0 %v850
      %852 = vmatprep.subr.mxu0 0.0
      %v853 = vand.u32 %v338, 4294901760
      %v854 = vsub.f32 %v338, %v853
      %v855 = vand.u32 %v854, 4294901760
      %856 = vmatpush1.msra.mxu0 %v855
      %857 = vmatprep.subr.mxu0 0.0
      %v858 = vand.u32 %v339, 4294901760
      %v859 = vsub.f32 %v339, %v858
      %v860 = vand.u32 %v859, 4294901760
      %861 = vmatpush1.msra.mxu0 %v860
      %862 = vmatprep.subr.mxu0 0.0
      %v863 = vand.u32 %v340, 4294901760
      %v864 = vsub.f32 %v340, %v863
      %v865 = vand.u32 %v864, 4294901760
      %866 = vmatpush1.msra.mxu0 %v865
      %867 = vmatprep.subr.mxu0 0.0
      %v868 = vand.u32 %v341, 4294901760
      %v869 = vsub.f32 %v341, %v868
      %v870 = vand.u32 %v869, 4294901760
      %871 = vmatpush1.msra.mxu0 %v870
      %872 = vmatprep.subr.mxu0 0.0
      %v873 = vand.u32 %v342, 4294901760
      %v874 = vsub.f32 %v342, %v873
      %v875 = vand.u32 %v874, 4294901760
      %876 = vmatpush1.msra.mxu0 %v875
      %877 = vmatprep.subr.mxu0 0.0
      %v878 = vand.u32 %v343, 4294901760
      %v879 = vsub.f32 %v343, %v878
      %v880 = vand.u32 %v879, 4294901760
      %881 = vmatpush1.msra.mxu0 %v880
      %882 = vmatprep.subr.mxu0 0.0
      %v883 = vand.u32 %v344, 4294901760
      %v884 = vsub.f32 %v344, %v883
      %v885 = vand.u32 %v884, 4294901760
      %886 = vmatpush1.msra.mxu0 %v885
      %887 = vmatprep.subr.mxu0 0.0
      %v888 = vand.u32 %v345, 4294901760
      %v889 = vsub.f32 %v345, %v888
      %v890 = vand.u32 %v889, 4294901760
      %891 = vmatpush1.msra.mxu0 %v890
      %892 = vmatprep.subr.mxu0 0.0
      %893 = vmatpush1.msra.mxu0 0.0
      %894 = vmatprep.subr.mxu0 0.0
      %895 = vmatpush1.msra.mxu0 0.0
      %896 = vmatprep.subr.mxu0 0.0
      %897 = vmatpush1.msra.mxu0 0.0
      %898 = vmatprep.subr.mxu0 0.0
      %899 = vmatpush1.msra.mxu0 0.0
      %900 = vmatprep.subr.mxu0 0.0
      %901 = vmatpush1.msra.mxu0 0.0
      %902 = vmatprep.subr.mxu0 0.0
      %903 = vmatpush1.msra.mxu0 0.0
      %904 = vmatprep.subr.mxu0 0.0
      %905 = vmatpush1.msra.mxu0 0.0
      %906 = vmatprep.subr.mxu0 0.0
      %907 = vmatpush1.msra.mxu0 0.0
      %908 = vmatprep.subr.mxu0 0.0
      %909 = vmatpush1.msra.mxu0 0.0
      %910 = vmatprep.subr.mxu0 0.0
      %911 = vmatpush1.msra.mxu0 0.0
      %912 = vmatprep.subr.mxu0 0.0
      %913 = vmatpush1.msra.mxu0 0.0
      %914 = vmatprep.subr.mxu0 0.0
      %915 = vmatpush1.msra.mxu0 0.0
      %916 = vmatprep.subr.mxu0 0.0
      %917 = vmatpush1.msra.mxu0 0.0
      %918 = vmatprep.subr.mxu0 0.0
      %919 = vmatpush1.msra.mxu0 0.0
      %920 = vmatprep.subr.mxu0 0.0
      %921 = vmatpush1.msra.mxu0 0.0
      %922 = vmatprep.subr.mxu0 0.0
      %923 = vmatpush1.msra.mxu0 0.0
      %924 = vmatprep.mubr.f32.mxu0 0.0
      %v925 = vand.u32 %v328, 4294901760
      %926 = vmatmul.mubr.f32.gmra.mrb[0].mxu0 %v925
      %v927 = vpop.f32.mrb[0].mxu0
      %v928 = vadd.f32 %v801, %v927
      %v929 = vpop.f32.mrb[0].mxu0
      %930 = vmatprep.mubr.f32.mxu0 0.0
      %v931 = vand.u32 %v329, 4294901760
      %932 = vmatmul.mubr.f32.gmra.mrb[0].mxu0 %v931
      %v933 = vpop.f32.mrb[0].mxu0
      %v934 = vadd.f32 %v809, %v933
      %v935 = vpop.f32.mrb[0].mxu0
      %936 = vdwg.mxu0
      %937 = vmatprep.subr.mxu0 0.0
      %v938 = vand.u32 %v330, 4294901760
      %939 = vmatpush1.msra.mxu0 %v938
      %940 = vmatprep.subr.mxu0 0.0
      %v941 = vand.u32 %v331, 4294901760
      %942 = vmatpush1.msra.mxu0 %v941
      %943 = vmatprep.subr.mxu0 0.0
      %v944 = vand.u32 %v332, 4294901760
      %945 = vmatpush1.msra.mxu0 %v944
      %946 = vmatprep.subr.mxu0 0.0
      %v947 = vand.u32 %v333, 4294901760
      %948 = vmatpush1.msra.mxu0 %v947
      %949 = vmatprep.subr.mxu0 0.0
      %v950 = vand.u32 %v334, 4294901760
      %951 = vmatpush1.msra.mxu0 %v950
      %952 = vmatprep.subr.mxu0 0.0
      %v953 = vand.u32 %v335, 4294901760
      %954 = vmatpush1.msra.mxu0 %v953
      %955 = vmatprep.subr.mxu0 0.0
      %v956 = vand.u32 %v336, 4294901760
      %957 = vmatpush1.msra.mxu0 %v956
      %958 = vmatprep.subr.mxu0 0.0
      %v959 = vand.u32 %v337, 4294901760
      %960 = vmatpush1.msra.mxu0 %v959
      %961 = vmatprep.subr.mxu0 0.0
      %v962 = vand.u32 %v338, 4294901760
      %963 = vmatpush1.msra.mxu0 %v962
      %964 = vmatprep.subr.mxu0 0.0
      %v965 = vand.u32 %v339, 4294901760
      %966 = vmatpush1.msra.mxu0 %v965
      %967 = vmatprep.subr.mxu0 0.0
      %v968 = vand.u32 %v340, 4294901760
      %969 = vmatpush1.msra.mxu0 %v968
      %970 = vmatprep.subr.mxu0 0.0
      %v971 = vand.u32 %v341, 4294901760
      %972 = vmatpush1.msra.mxu0 %v971
      %973 = vmatprep.subr.mxu0 0.0
      %v974 = vand.u32 %v342, 4294901760
      %975 = vmatpush1.msra.mxu0 %v974
      %976 = vmatprep.subr.mxu0 0.0
      %v977 = vand.u32 %v343, 4294901760
      %978 = vmatpush1.msra.mxu0 %v977
      %979 = vmatprep.subr.mxu0 0.0
      %v980 = vand.u32 %v344, 4294901760
      %981 = vmatpush1.msra.mxu0 %v980
      %982 = vmatprep.subr.mxu0 0.0
      %v983 = vand.u32 %v345, 4294901760
      %984 = vmatpush1.msra.mxu0 %v983
      %985 = vmatprep.subr.mxu0 0.0
      %986 = vmatpush1.msra.mxu0 0.0
      %987 = vmatprep.subr.mxu0 0.0
      %988 = vmatpush1.msra.mxu0 0.0
      %989 = vmatprep.subr.mxu0 0.0
      %990 = vmatpush1.msra.mxu0 0.0
      %991 = vmatprep.subr.mxu0 0.0
      %992 = vmatpush1.msra.mxu0 0.0
      %993 = vmatprep.subr.mxu0 0.0
      %994 = vmatpush1.msra.mxu0 0.0
      %995 = vmatprep.subr.mxu0 0.0
      %996 = vmatpush1.msra.mxu0 0.0
      %997 = vmatprep.subr.mxu0 0.0
      %998 = vmatpush1.msra.mxu0 0.0
      %999 = vmatprep.subr.mxu0 0.0
      %1000 = vmatpush1.msra.mxu0 0.0
      %1001 = vmatprep.subr.mxu0 0.0
      %1002 = vmatpush1.msra.mxu0 0.0
      %1003 = vmatprep.subr.mxu0 0.0
      %1004 = vmatpush1.msra.mxu0 0.0
      %1005 = vmatprep.subr.mxu0 0.0
      %1006 = vmatpush1.msra.mxu0 0.0
      %1007 = vmatprep.subr.mxu0 0.0
      %1008 = vmatpush1.msra.mxu0 0.0
      %1009 = vmatprep.subr.mxu0 0.0
      %1010 = vmatpush1.msra.mxu0 0.0
      %1011 = vmatprep.subr.mxu0 0.0
      %1012 = vmatpush1.msra.mxu0 0.0
      %1013 = vmatprep.subr.mxu0 0.0
      %1014 = vmatpush1.msra.mxu0 0.0
      %1015 = vmatprep.subr.mxu0 0.0
      %1016 = vmatpush1.msra.mxu0 0.0
      %1017 = vmatprep.mubr.f32.mxu0 0.0
      %v1018 = vand.u32 %v328, 4294901760
      %1019 = vmatmul.mubr.f32.gmra.mrb[0].mxu0 %v1018
      %v1020 = vpop.f32.mrb[0].mxu0
      %v1021 = vadd.f32 %v928, %v1020
      %v1022 = vpop.f32.mrb[0].mxu0
      %1023 = vmatprep.mubr.f32.mxu0 0.0
      %v1024 = vand.u32 %v329, 4294901760
      %1025 = vmatmul.mubr.f32.gmra.mrb[0].mxu0 %v1024
      %v1026 = vpop.f32.mrb[0].mxu0
      %v1027 = vadd.f32 %v934, %v1026
      %v1028 = vpop.f32.mrb[0].mxu0
      %1029 = vdwg.mxu0
      %v1030 = vld [vmem:[%s4] sm:$0xff]
      %v1031 = vld [vmem:[%s4 + $0x8] sm:$0xff]
      %v1032 = vld [vmem:[%s4 + $0x10] sm:$0xff]
      %v1033 = vld [vmem:[%s4 + $0x18] sm:$0xff]
      %v1034 = vld [vmem:[%s4 + $0x20] sm:$0xff]
      %v1035 = vld [vmem:[%s4 + $0x28] sm:$0xff]
      %v1036 = vld [vmem:[%s4 + $0x30] sm:$0xff]
      %v1037 = vld [vmem:[%s4 + $0x38] sm:$0xff]
      %v1038 = vld [vmem:[%s4 + $0x40] sm:$0xff]
      %v1039 = vld [vmem:[%s4 + $0x48] sm:$0xff]
      %v1040 = vld [vmem:[%s4 + $0x50] sm:$0xff]
      %v1041 = vld [vmem:[%s4 + $0x58] sm:$0xff]
      %v1042 = vld [vmem:[%s4 + $0x60] sm:$0xff]
      %v1043 = vld [vmem:[%s4 + $0x68] sm:$0xff]
      %v1044 = vld [vmem:[%s4 + $0x70] sm:$0xff]
      %v1045 = vld [vmem:[%s4 + $0x78] sm:$0xff]
      %1046 = vmatprep.subr.mxu0 0.0
      %v1047 = vand.u32 %v1030, 4294901760
      %1048 = vmatpush1.msra.mxu0 %v1047
      %1049 = vmatprep.subr.mxu0 0.0
      %v1050 = vand.u32 %v1031, 4294901760
      %1051 = vmatpush1.msra.mxu0 %v1050
      %1052 = vmatprep.subr.mxu0 0.0
      %v1053 = vand.u32 %v1032, 4294901760
      %1054 = vmatpush1.msra.mxu0 %v1053
      %1055 = vmatprep.subr.mxu0 0.0
      %v1056 = vand.u32 %v1033, 4294901760
      %1057 = vmatpush1.msra.mxu0 %v1056
      %1058 = vmatprep.subr.mxu0 0.0
      %v1059 = vand.u32 %v1034, 4294901760
      %1060 = vmatpush1.msra.mxu0 %v1059
      %1061 = vmatprep.subr.mxu0 0.0
      %v1062 = vand.u32 %v1035, 4294901760
      %1063 = vmatpush1.msra.mxu0 %v1062
      %1064 = vmatprep.subr.mxu0 0.0
      %v1065 = vand.u32 %v1036, 4294901760
      %1066 = vmatpush1.msra.mxu0 %v1065
      %1067 = vmatprep.subr.mxu0 0.0
      %v1068 = vand.u32 %v1037, 4294901760
      %1069 = vmatpush1.msra.mxu0 %v1068
      %1070 = vmatprep.subr.mxu0 0.0
      %v1071 = vand.u32 %v1038, 4294901760
      %1072 = vmatpush1.msra.mxu0 %v1071
      %1073 = vmatprep.subr.mxu0 0.0
      %v1074 = vand.u32 %v1039, 4294901760
      %1075 = vmatpush1.msra.mxu0 %v1074
      %1076 = vmatprep.subr.mxu0 0.0
      %v1077 = vand.u32 %v1040, 4294901760
      %1078 = vmatpush1.msra.mxu0 %v1077
      %1079 = vmatprep.subr.mxu0 0.0
      %v1080 = vand.u32 %v1041, 4294901760
      %1081 = vmatpush1.msra.mxu0 %v1080
      %1082 = vmatprep.subr.mxu0 0.0
      %v1083 = vand.u32 %v1042, 4294901760
      %1084 = vmatpush1.msra.mxu0 %v1083
      %1085 = vmatprep.subr.mxu0 0.0
      %v1086 = vand.u32 %v1043, 4294901760
      %1087 = vmatpush1.msra.mxu0 %v1086
      %1088 = vmatprep.subr.mxu0 0.0
      %v1089 = vand.u32 %v1044, 4294901760
      %1090 = vmatpush1.msra.mxu0 %v1089
      %1091 = vmatprep.subr.mxu0 0.0
      %v1092 = vand.u32 %v1045, 4294901760
      %1093 = vmatpush1.msra.mxu0 %v1092
      %1094 = vmatprep.subr.mxu0 0.0
      %1095 = vmatpush1.msra.mxu0 0.0
      %1096 = vmatprep.subr.mxu0 0.0
      %1097 = vmatpush1.msra.mxu0 0.0
      %1098 = vmatprep.subr.mxu0 0.0
      %1099 = vmatpush1.msra.mxu0 0.0
      %1100 = vmatprep.subr.mxu0 0.0
      %1101 = vmatpush1.msra.mxu0 0.0
      %1102 = vmatprep.subr.mxu0 0.0
      %1103 = vmatpush1.msra.mxu0 0.0
      %1104 = vmatprep.subr.mxu0 0.0
      %1105 = vmatpush1.msra.mxu0 0.0
      %1106 = vmatprep.subr.mxu0 0.0
      %1107 = vmatpush1.msra.mxu0 0.0
      %1108 = vmatprep.subr.mxu0 0.0
      %1109 = vmatpush1.msra.mxu0 0.0
      %1110 = vmatprep.subr.mxu0 0.0
      %1111 = vmatpush1.msra.mxu0 0.0
      %1112 = vmatprep.subr.mxu0 0.0
      %1113 = vmatpush1.msra.mxu0 0.0
      %1114 = vmatprep.subr.mxu0 0.0
      %1115 = vmatpush1.msra.mxu0 0.0
      %1116 = vmatprep.subr.mxu0 0.0
      %1117 = vmatpush1.msra.mxu0 0.0
      %1118 = vmatprep.subr.mxu0 0.0
      %1119 = vmatpush1.msra.mxu0 0.0
      %1120 = vmatprep.subr.mxu0 0.0
      %1121 = vmatpush1.msra.mxu0 0.0
      %1122 = vmatprep.subr.mxu0 0.0
      %1123 = vmatpush1.msra.mxu0 0.0
      %1124 = vmatprep.subr.mxu0 0.0
      %1125 = vmatpush1.msra.mxu0 0.0
      %1126 = vmatprep.mubr.f32.mxu0 0.0
      %v1127 = vand.u32 %v1021, 4294901760
      %v1128 = vsub.f32 %v1021, %v1127
      %v1129 = vand.u32 %v1128, 4294901760
      %v1130 = vsub.f32 %v1128, %v1129
      %v1131 = vand.u32 %v1130, 4294901760
      %1132 = vmatmul.mubr.f32.gmra.mrb[0].mxu0 %v1131
      %v1133 = vpop.f32.mrb[0].mxu0
      %v1134 = vadd.f32 0.0, %v1133
      %v1135 = vpop.f32.mrb[0].mxu0
      %1136 = vmatprep.mubr.f32.mxu0 0.0
      %v1137 = vand.u32 %v1027, 4294901760
      %v1138 = vsub.f32 %v1027, %v1137
      %v1139 = vand.u32 %v1138, 4294901760
      %v1140 = vsub.f32 %v1138, %v1139
      %v1141 = vand.u32 %v1140, 4294901760
      %1142 = vmatmul.mubr.f32.gmra.mrb[0].mxu0 %v1141
      %v1143 = vpop.f32.mrb[0].mxu0
      %v1144 = vadd.f32 0.0, %v1143
      %v1145 = vpop.f32.mrb[0].mxu0
      %1146 = vdwg.mxu0
      %1147 = vmatprep.subr.mxu0 0.0
      %v1148 = vand.u32 %v1030, 4294901760
      %v1149 = vsub.f32 %v1030, %v1148
      %v1150 = vand.u32 %v1149, 4294901760
      %v1151 = vsub.f32 %v1149, %v1150
      %v1152 = vand.u32 %v1151, 4294901760
      %1153 = vmatpush1.msra.mxu0 %v1152
      %1154 = vmatprep.subr.mxu0 0.0
      %v1155 = vand.u32 %v1031, 4294901760
      %v1156 = vsub.f32 %v1031, %v1155
      %v1157 = vand.u32 %v1156, 4294901760
      %v1158 = vsub.f32 %v1156, %v1157
      %v1159 = vand.u32 %v1158, 4294901760
      %1160 = vmatpush1.msra.mxu0 %v1159
      %1161 = vmatprep.subr.mxu0 0.0
      %v1162 = vand.u32 %v1032, 4294901760
      %v1163 = vsub.f32 %v1032, %v1162
      %v1164 = vand.u32 %v1163, 4294901760
      %v1165 = vsub.f32 %v1163, %v1164
      %v1166 = vand.u32 %v1165, 4294901760
      %1167 = vmatpush1.msra.mxu0 %v1166
      %1168 = vmatprep.subr.mxu0 0.0
      %v1169 = vand.u32 %v1033, 4294901760
      %v1170 = vsub.f32 %v1033, %v1169
      %v1171 = vand.u32 %v1170, 4294901760
      %v1172 = vsub.f32 %v1170, %v1171
      %v1173 = vand.u32 %v1172, 4294901760
      %1174 = vmatpush1.msra.mxu0 %v1173
      %1175 = vmatprep.subr.mxu0 0.0
      %v1176 = vand.u32 %v1034, 4294901760
      %v1177 = vsub.f32 %v1034, %v1176
      %v1178 = vand.u32 %v1177, 4294901760
      %v1179 = vsub.f32 %v1177, %v1178
      %v1180 = vand.u32 %v1179, 4294901760
      %1181 = vmatpush1.msra.mxu0 %v1180
      %1182 = vmatprep.subr.mxu0 0.0
      %v1183 = vand.u32 %v1035, 4294901760
      %v1184 = vsub.f32 %v1035, %v1183
      %v1185 = vand.u32 %v1184, 4294901760
      %v1186 = vsub.f32 %v1184, %v1185
      %v1187 = vand.u32 %v1186, 4294901760
      %1188 = vmatpush1.msra.mxu0 %v1187
      %1189 = vmatprep.subr.mxu0 0.0
      %v1190 = vand.u32 %v1036, 4294901760
      %v1191 = vsub.f32 %v1036, %v1190
      %v1192 = vand.u32 %v1191, 4294901760
      %v1193 = vsub.f32 %v1191, %v1192
      %v1194 = vand.u32 %v1193, 4294901760
      %1195 = vmatpush1.msra.mxu0 %v1194
      %1196 = vmatprep.subr.mxu0 0.0
      %v1197 = vand.u32 %v1037, 4294901760
      %v1198 = vsub.f32 %v1037, %v1197
      %v1199 = vand.u32 %v1198, 4294901760
      %v1200 = vsub.f32 %v1198, %v1199
      %v1201 = vand.u32 %v1200, 4294901760
      %1202 = vmatpush1.msra.mxu0 %v1201
      %1203 = vmatprep.subr.mxu0 0.0
      %v1204 = vand.u32 %v1038, 4294901760
      %v1205 = vsub.f32 %v1038, %v1204
      %v1206 = vand.u32 %v1205, 4294901760
      %v1207 = vsub.f32 %v1205, %v1206
      %v1208 = vand.u32 %v1207, 4294901760
      %1209 = vmatpush1.msra.mxu0 %v1208
      %1210 = vmatprep.subr.mxu0 0.0
      %v1211 = vand.u32 %v1039, 4294901760
      %v1212 = vsub.f32 %v1039, %v1211
      %v1213 = vand.u32 %v1212, 4294901760
      %v1214 = vsub.f32 %v1212, %v1213
      %v1215 = vand.u32 %v1214, 4294901760
      %1216 = vmatpush1.msra.mxu0 %v1215
      %1217 = vmatprep.subr.mxu0 0.0
      %v1218 = vand.u32 %v1040, 4294901760
      %v1219 = vsub.f32 %v1040, %v1218
      %v1220 = vand.u32 %v1219, 4294901760
      %v1221 = vsub.f32 %v1219, %v1220
      %v1222 = vand.u32 %v1221, 4294901760
      %1223 = vmatpush1.msra.mxu0 %v1222
      %1224 = vmatprep.subr.mxu0 0.0
      %v1225 = vand.u32 %v1041, 4294901760
      %v1226 = vsub.f32 %v1041, %v1225
      %v1227 = vand.u32 %v1226, 4294901760
      %v1228 = vsub.f32 %v1226, %v1227
      %v1229 = vand.u32 %v1228, 4294901760
      %1230 = vmatpush1.msra.mxu0 %v1229
      %1231 = vmatprep.subr.mxu0 0.0
      %v1232 = vand.u32 %v1042, 4294901760
      %v1233 = vsub.f32 %v1042, %v1232
      %v1234 = vand.u32 %v1233, 4294901760
      %v1235 = vsub.f32 %v1233, %v1234
      %v1236 = vand.u32 %v1235, 4294901760
      %1237 = vmatpush1.msra.mxu0 %v1236
      %1238 = vmatprep.subr.mxu0 0.0
      %v1239 = vand.u32 %v1043, 4294901760
      %v1240 = vsub.f32 %v1043, %v1239
      %v1241 = vand.u32 %v1240, 4294901760
      %v1242 = vsub.f32 %v1240, %v1241
      %v1243 = vand.u32 %v1242, 4294901760
      %1244 = vmatpush1.msra.mxu0 %v1243
      %1245 = vmatprep.subr.mxu0 0.0
      %v1246 = vand.u32 %v1044, 4294901760
      %v1247 = vsub.f32 %v1044, %v1246
      %v1248 = vand.u32 %v1247, 4294901760
      %v1249 = vsub.f32 %v1247, %v1248
      %v1250 = vand.u32 %v1249, 4294901760
      %1251 = vmatpush1.msra.mxu0 %v1250
      %1252 = vmatprep.subr.mxu0 0.0
      %v1253 = vand.u32 %v1045, 4294901760
      %v1254 = vsub.f32 %v1045, %v1253
      %v1255 = vand.u32 %v1254, 4294901760
      %v1256 = vsub.f32 %v1254, %v1255
      %v1257 = vand.u32 %v1256, 4294901760
      %1258 = vmatpush1.msra.mxu0 %v1257
      %1259 = vmatprep.subr.mxu0 0.0
      %1260 = vmatpush1.msra.mxu0 0.0
      %1261 = vmatprep.subr.mxu0 0.0
      %1262 = vmatpush1.msra.mxu0 0.0
      %1263 = vmatprep.subr.mxu0 0.0
      %1264 = vmatpush1.msra.mxu0 0.0
      %1265 = vmatprep.subr.mxu0 0.0
      %1266 = vmatpush1.msra.mxu0 0.0
      %1267 = vmatprep.subr.mxu0 0.0
      %1268 = vmatpush1.msra.mxu0 0.0
      %1269 = vmatprep.subr.mxu0 0.0
      %1270 = vmatpush1.msra.mxu0 0.0
      %1271 = vmatprep.subr.mxu0 0.0
      %1272 = vmatpush1.msra.mxu0 0.0
      %1273 = vmatprep.subr.mxu0 0.0
      %1274 = vmatpush1.msra.mxu0 0.0
      %1275 = vmatprep.subr.mxu0 0.0
      %1276 = vmatpush1.msra.mxu0 0.0
      %1277 = vmatprep.subr.mxu0 0.0
      %1278 = vmatpush1.msra.mxu0 0.0
      %1279 = vmatprep.subr.mxu0 0.0
      %1280 = vmatpush1.msra.mxu0 0.0
      %1281 = vmatprep.subr.mxu0 0.0
      %1282 = vmatpush1.msra.mxu0 0.0
      %1283 = vmatprep.subr.mxu0 0.0
      %1284 = vmatpush1.msra.mxu0 0.0
      %1285 = vmatprep.subr.mxu0 0.0
      %1286 = vmatpush1.msra.mxu0 0.0
      %1287 = vmatprep.subr.mxu0 0.0
      %1288 = vmatpush1.msra.mxu0 0.0
      %1289 = vmatprep.subr.mxu0 0.0
      %1290 = vmatpush1.msra.mxu0 0.0
      %1291 = vmatprep.mubr.f32.mxu0 0.0
      %v1292 = vand.u32 %v1021, 4294901760
      %1293 = vmatmul.mubr.f32.gmra.mrb[0].mxu0 %v1292
      %v1294 = vpop.f32.mrb[0].mxu0
      %v1295 = vadd.f32 %v1134, %v1294
      %v1296 = vpop.f32.mrb[0].mxu0
      %1297 = vmatprep.mubr.f32.mxu0 0.0
      %v1298 = vand.u32 %v1027, 4294901760
      %1299 = vmatmul.mubr.f32.gmra.mrb[0].mxu0 %v1298
      %v1300 = vpop.f32.mrb[0].mxu0
      %v1301 = vadd.f32 %v1144, %v1300
      %v1302 = vpop.f32.mrb[0].mxu0
      %1303 = vdwg.mxu0
      %1304 = vmatprep.subr.mxu0 0.0
      %v1305 = vand.u32 %v1030, 4294901760
      %v1306 = vsub.f32 %v1030, %v1305
      %1307 = vmatpush1.msra.mxu0 %v1306
      %1308 = vmatprep.subr.mxu0 0.0
      %v1309 = vand.u32 %v1031, 4294901760
      %v1310 = vsub.f32 %v1031, %v1309
      %1311 = vmatpush1.msra.mxu0 %v1310
      %1312 = vmatprep.subr.mxu0 0.0
      %v1313 = vand.u32 %v1032, 4294901760
      %v1314 = vsub.f32 %v1032, %v1313
      %1315 = vmatpush1.msra.mxu0 %v1314
      %1316 = vmatprep.subr.mxu0 0.0
      %v1317 = vand.u32 %v1033, 4294901760
      %v1318 = vsub.f32 %v1033, %v1317
      %1319 = vmatpush1.msra.mxu0 %v1318
      %1320 = vmatprep.subr.mxu0 0.0
      %v1321 = vand.u32 %v1034, 4294901760
      %v1322 = vsub.f32 %v1034, %v1321
      %1323 = vmatpush1.msra.mxu0 %v1322
      %1324 = vmatprep.subr.mxu0 0.0
      %v1325 = vand.u32 %v1035, 4294901760
      %v1326 = vsub.f32 %v1035, %v1325
      %1327 = vmatpush1.msra.mxu0 %v1326
      %1328 = vmatprep.subr.mxu0 0.0
      %v1329 = vand.u32 %v1036, 4294901760
      %v1330 = vsub.f32 %v1036, %v1329
      %1331 = vmatpush1.msra.mxu0 %v1330
      %1332 = vmatprep.subr.mxu0 0.0
      %v1333 = vand.u32 %v1037, 4294901760
      %v1334 = vsub.f32 %v1037, %v1333
      %1335 = vmatpush1.msra.mxu0 %v1334
      %1336 = vmatprep.subr.mxu0 0.0
      %v1337 = vand.u32 %v1038, 4294901760
      %v1338 = vsub.f32 %v1038, %v1337
      %1339 = vmatpush1.msra.mxu0 %v1338
      %1340 = vmatprep.subr.mxu0 0.0
      %v1341 = vand.u32 %v1039, 4294901760
      %v1342 = vsub.f32 %v1039, %v1341
      %1343 = vmatpush1.msra.mxu0 %v1342
      %1344 = vmatprep.subr.mxu0 0.0
      %v1345 = vand.u32 %v1040, 4294901760
      %v1346 = vsub.f32 %v1040, %v1345
      %1347 = vmatpush1.msra.mxu0 %v1346
      %1348 = vmatprep.subr.mxu0 0.0
      %v1349 = vand.u32 %v1041, 4294901760
      %v1350 = vsub.f32 %v1041, %v1349
      %1351 = vmatpush1.msra.mxu0 %v1350
      %1352 = vmatprep.subr.mxu0 0.0
      %v1353 = vand.u32 %v1042, 4294901760
      %v1354 = vsub.f32 %v1042, %v1353
      %1355 = vmatpush1.msra.mxu0 %v1354
      %1356 = vmatprep.subr.mxu0 0.0
      %v1357 = vand.u32 %v1043, 4294901760
      %v1358 = vsub.f32 %v1043, %v1357
      %1359 = vmatpush1.msra.mxu0 %v1358
      %1360 = vmatprep.subr.mxu0 0.0
      %v1361 = vand.u32 %v1044, 4294901760
      %v1362 = vsub.f32 %v1044, %v1361
      %1363 = vmatpush1.msra.mxu0 %v1362
      %1364 = vmatprep.subr.mxu0 0.0
      %v1365 = vand.u32 %v1045, 4294901760
      %v1366 = vsub.f32 %v1045, %v1365
      %1367 = vmatpush1.msra.mxu0 %v1366
      %1368 = vmatprep.subr.mxu0 0.0
      %1369 = vmatpush1.msra.mxu0 0.0
      %1370 = vmatprep.subr.mxu0 0.0
      %1371 = vmatpush1.msra.mxu0 0.0
      %1372 = vmatprep.subr.mxu0 0.0
      %1373 = vmatpush1.msra.mxu0 0.0
      %1374 = vmatprep.subr.mxu0 0.0
      %1375 = vmatpush1.msra.mxu0 0.0
      %1376 = vmatprep.subr.mxu0 0.0
      %1377 = vmatpush1.msra.mxu0 0.0
      %1378 = vmatprep.subr.mxu0 0.0
      %1379 = vmatpush1.msra.mxu0 0.0
      %1380 = vmatprep.subr.mxu0 0.0
      %1381 = vmatpush1.msra.mxu0 0.0
      %1382 = vmatprep.subr.mxu0 0.0
      %1383 = vmatpush1.msra.mxu0 0.0
      %1384 = vmatprep.subr.mxu0 0.0
      %1385 = vmatpush1.msra.mxu0 0.0
      %1386 = vmatprep.subr.mxu0 0.0
      %1387 = vmatpush1.msra.mxu0 0.0
      %1388 = vmatprep.subr.mxu0 0.0
      %1389 = vmatpush1.msra.mxu0 0.0
      %1390 = vmatprep.subr.mxu0 0.0
      %1391 = vmatpush1.msra.mxu0 0.0
      %1392 = vmatprep.subr.mxu0 0.0
      %1393 = vmatpush1.msra.mxu0 0.0
      %1394 = vmatprep.subr.mxu0 0.0
      %1395 = vmatpush1.msra.mxu0 0.0
      %1396 = vmatprep.subr.mxu0 0.0
      %1397 = vmatpush1.msra.mxu0 0.0
      %1398 = vmatprep.subr.mxu0 0.0
      %1399 = vmatpush1.msra.mxu0 0.0
      %1400 = vmatprep.mubr.f32.mxu0 0.0
      %v1401 = vand.u32 %v1021, 4294901760
      %v1402 = vsub.f32 %v1021, %v1401
      %1403 = vmatmul.mubr.f32.gmra.mrb[0].mxu0 %v1402
      %v1404 = vpop.f32.mrb[0].mxu0
      %v1405 = vadd.f32 %v1295, %v1404
      %v1406 = vpop.f32.mrb[0].mxu0
      %1407 = vmatprep.mubr.f32.mxu0 0.0
      %v1408 = vand.u32 %v1027, 4294901760
      %v1409 = vsub.f32 %v1027, %v1408
      %1410 = vmatmul.mubr.f32.gmra.mrb[0].mxu0 %v1409
      %v1411 = vpop.f32.mrb[0].mxu0
      %v1412 = vadd.f32 %v1301, %v1411
      %v1413 = vpop.f32.mrb[0].mxu0
      %1414 = vdwg.mxu0
      %1415 = vmatprep.subr.mxu0 0.0
      %v1416 = vand.u32 %v1030, 4294901760
      %1417 = vmatpush1.msra.mxu0 %v1416
      %1418 = vmatprep.subr.mxu0 0.0
      %v1419 = vand.u32 %v1031, 4294901760
      %1420 = vmatpush1.msra.mxu0 %v1419
      %1421 = vmatprep.subr.mxu0 0.0
      %v1422 = vand.u32 %v1032, 4294901760
      %1423 = vmatpush1.msra.mxu0 %v1422
      %1424 = vmatprep.subr.mxu0 0.0
      %v1425 = vand.u32 %v1033, 4294901760
      %1426 = vmatpush1.msra.mxu0 %v1425
      %1427 = vmatprep.subr.mxu0 0.0
      %v1428 = vand.u32 %v1034, 4294901760
      %1429 = vmatpush1.msra.mxu0 %v1428
      %1430 = vmatprep.subr.mxu0 0.0
      %v1431 = vand.u32 %v1035, 4294901760
      %1432 = vmatpush1.msra.mxu0 %v1431
      %1433 = vmatprep.subr.mxu0 0.0
      %v1434 = vand.u32 %v1036, 4294901760
      %1435 = vmatpush1.msra.mxu0 %v1434
      %1436 = vmatprep.subr.mxu0 0.0
      %v1437 = vand.u32 %v1037, 4294901760
      %1438 = vmatpush1.msra.mxu0 %v1437
      %1439 = vmatprep.subr.mxu0 0.0
      %v1440 = vand.u32 %v1038, 4294901760
      %1441 = vmatpush1.msra.mxu0 %v1440
      %1442 = vmatprep.subr.mxu0 0.0
      %v1443 = vand.u32 %v1039, 4294901760
      %1444 = vmatpush1.msra.mxu0 %v1443
      %1445 = vmatprep.subr.mxu0 0.0
      %v1446 = vand.u32 %v1040, 4294901760
      %1447 = vmatpush1.msra.mxu0 %v1446
      %1448 = vmatprep.subr.mxu0 0.0
      %v1449 = vand.u32 %v1041, 4294901760
      %1450 = vmatpush1.msra.mxu0 %v1449
      %1451 = vmatprep.subr.mxu0 0.0
      %v1452 = vand.u32 %v1042, 4294901760
      %1453 = vmatpush1.msra.mxu0 %v1452
      %1454 = vmatprep.subr.mxu0 0.0
      %v1455 = vand.u32 %v1043, 4294901760
      %1456 = vmatpush1.msra.mxu0 %v1455
      %1457 = vmatprep.subr.mxu0 0.0
      %v1458 = vand.u32 %v1044, 4294901760
      %1459 = vmatpush1.msra.mxu0 %v1458
      %1460 = vmatprep.subr.mxu0 0.0
      %v1461 = vand.u32 %v1045, 4294901760
      %1462 = vmatpush1.msra.mxu0 %v1461
      %1463 = vmatprep.subr.mxu0 0.0
      %1464 = vmatpush1.msra.mxu0 0.0
      %1465 = vmatprep.subr.mxu0 0.0
      %1466 = vmatpush1.msra.mxu0 0.0
      %1467 = vmatprep.subr.mxu0 0.0
      %1468 = vmatpush1.msra.mxu0 0.0
      %1469 = vmatprep.subr.mxu0 0.0
      %1470 = vmatpush1.msra.mxu0 0.0
      %1471 = vmatprep.subr.mxu0 0.0
      %1472 = vmatpush1.msra.mxu0 0.0
      %1473 = vmatprep.subr.mxu0 0.0
      %1474 = vmatpush1.msra.mxu0 0.0
      %1475 = vmatprep.subr.mxu0 0.0
      %1476 = vmatpush1.msra.mxu0 0.0
      %1477 = vmatprep.subr.mxu0 0.0
      %1478 = vmatpush1.msra.mxu0 0.0
      %1479 = vmatprep.subr.mxu0 0.0
      %1480 = vmatpush1.msra.mxu0 0.0
      %1481 = vmatprep.subr.mxu0 0.0
      %1482 = vmatpush1.msra.mxu0 0.0
      %1483 = vmatprep.subr.mxu0 0.0
      %1484 = vmatpush1.msra.mxu0 0.0
      %1485 = vmatprep.subr.mxu0 0.0
      %1486 = vmatpush1.msra.mxu0 0.0
      %1487 = vmatprep.subr.mxu0 0.0
      %1488 = vmatpush1.msra.mxu0 0.0
      %1489 = vmatprep.subr.mxu0 0.0
      %1490 = vmatpush1.msra.mxu0 0.0
      %1491 = vmatprep.subr.mxu0 0.0
      %1492 = vmatpush1.msra.mxu0 0.0
      %1493 = vmatprep.subr.mxu0 0.0
      %1494 = vmatpush1.msra.mxu0 0.0
      %1495 = vmatprep.mubr.f32.mxu0 0.0
      %v1496 = vand.u32 %v1021, 4294901760
      %v1497 = vsub.f32 %v1021, %v1496
      %v1498 = vand.u32 %v1497, 4294901760
      %1499 = vmatmul.mubr.f32.gmra.mrb[0].mxu0 %v1498
      %v1500 = vpop.f32.mrb[0].mxu0
      %v1501 = vadd.f32 %v1405, %v1500
      %v1502 = vpop.f32.mrb[0].mxu0
      %1503 = vmatprep.mubr.f32.mxu0 0.0
      %v1504 = vand.u32 %v1027, 4294901760
      %v1505 = vsub.f32 %v1027, %v1504
      %v1506 = vand.u32 %v1505, 4294901760
      %1507 = vmatmul.mubr.f32.gmra.mrb[0].mxu0 %v1506
      %v1508 = vpop.f32.mrb[0].mxu0
      %v1509 = vadd.f32 %v1412, %v1508
      %v1510 = vpop.f32.mrb[0].mxu0
      %1511 = vdwg.mxu0
      %1512 = vmatprep.subr.mxu0 0.0
      %v1513 = vand.u32 %v1030, 4294901760
      %v1514 = vsub.f32 %v1030, %v1513
      %v1515 = vand.u32 %v1514, 4294901760
      %1516 = vmatpush1.msra.mxu0 %v1515
      %1517 = vmatprep.subr.mxu0 0.0
      %v1518 = vand.u32 %v1031, 4294901760
      %v1519 = vsub.f32 %v1031, %v1518
      %v1520 = vand.u32 %v1519, 4294901760
      %1521 = vmatpush1.msra.mxu0 %v1520
      %1522 = vmatprep.subr.mxu0 0.0
      %v1523 = vand.u32 %v1032, 4294901760
      %v1524 = vsub.f32 %v1032, %v1523
      %v1525 = vand.u32 %v1524, 4294901760
      %1526 = vmatpush1.msra.mxu0 %v1525
      %1527 = vmatprep.subr.mxu0 0.0
      %v1528 = vand.u32 %v1033, 4294901760
      %v1529 = vsub.f32 %v1033, %v1528
      %v1530 = vand.u32 %v1529, 4294901760
      %1531 = vmatpush1.msra.mxu0 %v1530
      %1532 = vmatprep.subr.mxu0 0.0
      %v1533 = vand.u32 %v1034, 4294901760
      %v1534 = vsub.f32 %v1034, %v1533
      %v1535 = vand.u32 %v1534, 4294901760
      %1536 = vmatpush1.msra.mxu0 %v1535
      %1537 = vmatprep.subr.mxu0 0.0
      %v1538 = vand.u32 %v1035, 4294901760
      %v1539 = vsub.f32 %v1035, %v1538
      %v1540 = vand.u32 %v1539, 4294901760
      %1541 = vmatpush1.msra.mxu0 %v1540
      %1542 = vmatprep.subr.mxu0 0.0
      %v1543 = vand.u32 %v1036, 4294901760
      %v1544 = vsub.f32 %v1036, %v1543
      %v1545 = vand.u32 %v1544, 4294901760
      %1546 = vmatpush1.msra.mxu0 %v1545
      %1547 = vmatprep.subr.mxu0 0.0
      %v1548 = vand.u32 %v1037, 4294901760
      %v1549 = vsub.f32 %v1037, %v1548
      %v1550 = vand.u32 %v1549, 4294901760
      %1551 = vmatpush1.msra.mxu0 %v1550
      %1552 = vmatprep.subr.mxu0 0.0
      %v1553 = vand.u32 %v1038, 4294901760
      %v1554 = vsub.f32 %v1038, %v1553
      %v1555 = vand.u32 %v1554, 4294901760
      %1556 = vmatpush1.msra.mxu0 %v1555
      %1557 = vmatprep.subr.mxu0 0.0
      %v1558 = vand.u32 %v1039, 4294901760
      %v1559 = vsub.f32 %v1039, %v1558
      %v1560 = vand.u32 %v1559, 4294901760
      %1561 = vmatpush1.msra.mxu0 %v1560
      %1562 = vmatprep.subr.mxu0 0.0
      %v1563 = vand.u32 %v1040, 4294901760
      %v1564 = vsub.f32 %v1040, %v1563
      %v1565 = vand.u32 %v1564, 4294901760
      %1566 = vmatpush1.msra.mxu0 %v1565
      %1567 = vmatprep.subr.mxu0 0.0
      %v1568 = vand.u32 %v1041, 4294901760
      %v1569 = vsub.f32 %v1041, %v1568
      %v1570 = vand.u32 %v1569, 4294901760
      %1571 = vmatpush1.msra.mxu0 %v1570
      %1572 = vmatprep.subr.mxu0 0.0
      %v1573 = vand.u32 %v1042, 4294901760
      %v1574 = vsub.f32 %v1042, %v1573
      %v1575 = vand.u32 %v1574, 4294901760
      %1576 = vmatpush1.msra.mxu0 %v1575
      %1577 = vmatprep.subr.mxu0 0.0
      %v1578 = vand.u32 %v1043, 4294901760
      %v1579 = vsub.f32 %v1043, %v1578
      %v1580 = vand.u32 %v1579, 4294901760
      %1581 = vmatpush1.msra.mxu0 %v1580
      %1582 = vmatprep.subr.mxu0 0.0
      %v1583 = vand.u32 %v1044, 4294901760
      %v1584 = vsub.f32 %v1044, %v1583
      %v1585 = vand.u32 %v1584, 4294901760
      %1586 = vmatpush1.msra.mxu0 %v1585
      %1587 = vmatprep.subr.mxu0 0.0
      %v1588 = vand.u32 %v1045, 4294901760
      %v1589 = vsub.f32 %v1045, %v1588
      %v1590 = vand.u32 %v1589, 4294901760
      %1591 = vmatpush1.msra.mxu0 %v1590
      %1592 = vmatprep.subr.mxu0 0.0
      %1593 = vmatpush1.msra.mxu0 0.0
      %1594 = vmatprep.subr.mxu0 0.0
      %1595 = vmatpush1.msra.mxu0 0.0
      %1596 = vmatprep.subr.mxu0 0.0
      %1597 = vmatpush1.msra.mxu0 0.0
      %1598 = vmatprep.subr.mxu0 0.0
      %1599 = vmatpush1.msra.mxu0 0.0
      %1600 = vmatprep.subr.mxu0 0.0
      %1601 = vmatpush1.msra.mxu0 0.0
      %1602 = vmatprep.subr.mxu0 0.0
      %1603 = vmatpush1.msra.mxu0 0.0
      %1604 = vmatprep.subr.mxu0 0.0
      %1605 = vmatpush1.msra.mxu0 0.0
      %1606 = vmatprep.subr.mxu0 0.0
      %1607 = vmatpush1.msra.mxu0 0.0
      %1608 = vmatprep.subr.mxu0 0.0
      %1609 = vmatpush1.msra.mxu0 0.0
      %1610 = vmatprep.subr.mxu0 0.0
      %1611 = vmatpush1.msra.mxu0 0.0
      %1612 = vmatprep.subr.mxu0 0.0
      %1613 = vmatpush1.msra.mxu0 0.0
      %1614 = vmatprep.subr.mxu0 0.0
      %1615 = vmatpush1.msra.mxu0 0.0
      %1616 = vmatprep.subr.mxu0 0.0
      %1617 = vmatpush1.msra.mxu0 0.0
      %1618 = vmatprep.subr.mxu0 0.0
      %1619 = vmatpush1.msra.mxu0 0.0
      %1620 = vmatprep.subr.mxu0 0.0
      %1621 = vmatpush1.msra.mxu0 0.0
      %1622 = vmatprep.subr.mxu0 0.0
      %1623 = vmatpush1.msra.mxu0 0.0
      %1624 = vmatprep.mubr.f32.mxu0 0.0
      %v1625 = vand.u32 %v1021, 4294901760
      %1626 = vmatmul.mubr.f32.gmra.mrb[0].mxu0 %v1625
      %v1627 = vpop.f32.mrb[0].mxu0
      %v1628 = vadd.f32 %v1501, %v1627
      %v1629 = vpop.f32.mrb[0].mxu0
      %1630 = vmatprep.mubr.f32.mxu0 0.0
      %v1631 = vand.u32 %v1027, 4294901760
      %1632 = vmatmul.mubr.f32.gmra.mrb[0].mxu0 %v1631
      %v1633 = vpop.f32.mrb[0].mxu0
      %v1634 = vadd.f32 %v1509, %v1633
      %v1635 = vpop.f32.mrb[0].mxu0
      %1636 = vdwg.mxu0
      %1637 = vmatprep.subr.mxu0 0.0
      %v1638 = vand.u32 %v1030, 4294901760
      %1639 = vmatpush1.msra.mxu0 %v1638
      %1640 = vmatprep.subr.mxu0 0.0
      %v1641 = vand.u32 %v1031, 4294901760
      %1642 = vmatpush1.msra.mxu0 %v1641
      %1643 = vmatprep.subr.mxu0 0.0
      %v1644 = vand.u32 %v1032, 4294901760
      %1645 = vmatpush1.msra.mxu0 %v1644
      %1646 = vmatprep.subr.mxu0 0.0
      %v1647 = vand.u32 %v1033, 4294901760
      %1648 = vmatpush1.msra.mxu0 %v1647
      %1649 = vmatprep.subr.mxu0 0.0
      %v1650 = vand.u32 %v1034, 4294901760
      %1651 = vmatpush1.msra.mxu0 %v1650
      %1652 = vmatprep.subr.mxu0 0.0
      %v1653 = vand.u32 %v1035, 4294901760
      %1654 = vmatpush1.msra.mxu0 %v1653
      %1655 = vmatprep.subr.mxu0 0.0
      %v1656 = vand.u32 %v1036, 4294901760
      %1657 = vmatpush1.msra.mxu0 %v1656
      %1658 = vmatprep.subr.mxu0 0.0
      %v1659 = vand.u32 %v1037, 4294901760
      %1660 = vmatpush1.msra.mxu0 %v1659
      %1661 = vmatprep.subr.mxu0 0.0
      %v1662 = vand.u32 %v1038, 4294901760
      %1663 = vmatpush1.msra.mxu0 %v1662
      %1664 = vmatprep.subr.mxu0 0.0
      %v1665 = vand.u32 %v1039, 4294901760
      %1666 = vmatpush1.msra.mxu0 %v1665
      %1667 = vmatprep.subr.mxu0 0.0
      %v1668 = vand.u32 %v1040, 4294901760
      %1669 = vmatpush1.msra.mxu0 %v1668
      %1670 = vmatprep.subr.mxu0 0.0
      %v1671 = vand.u32 %v1041, 4294901760
      %1672 = vmatpush1.msra.mxu0 %v1671
      %1673 = vmatprep.subr.mxu0 0.0
      %v1674 = vand.u32 %v1042, 4294901760
      %1675 = vmatpush1.msra.mxu0 %v1674
      %1676 = vmatprep.subr.mxu0 0.0
      %v1677 = vand.u32 %v1043, 4294901760
      %1678 = vmatpush1.msra.mxu0 %v1677
      %1679 = vmatprep.subr.mxu0 0.0
      %v1680 = vand.u32 %v1044, 4294901760
      %1681 = vmatpush1.msra.mxu0 %v1680
      %1682 = vmatprep.subr.mxu0 0.0
      %v1683 = vand.u32 %v1045, 4294901760
      %1684 = vmatpush1.msra.mxu0 %v1683
      %1685 = vmatprep.subr.mxu0 0.0
      %1686 = vmatpush1.msra.mxu0 0.0
      %1687 = vmatprep.subr.mxu0 0.0
      %1688 = vmatpush1.msra.mxu0 0.0
      %1689 = vmatprep.subr.mxu0 0.0
      %1690 = vmatpush1.msra.mxu0 0.0
      %1691 = vmatprep.subr.mxu0 0.0
      %1692 = vmatpush1.msra.mxu0 0.0
      %1693 = vmatprep.subr.mxu0 0.0
      %1694 = vmatpush1.msra.mxu0 0.0
      %1695 = vmatprep.subr.mxu0 0.0
      %1696 = vmatpush1.msra.mxu0 0.0
      %1697 = vmatprep.subr.mxu0 0.0
      %1698 = vmatpush1.msra.mxu0 0.0
      %1699 = vmatprep.subr.mxu0 0.0
      %1700 = vmatpush1.msra.mxu0 0.0
      %1701 = vmatprep.subr.mxu0 0.0
      %1702 = vmatpush1.msra.mxu0 0.0
      %1703 = vmatprep.subr.mxu0 0.0
      %1704 = vmatpush1.msra.mxu0 0.0
      %1705 = vmatprep.subr.mxu0 0.0
      %1706 = vmatpush1.msra.mxu0 0.0
      %1707 = vmatprep.subr.mxu0 0.0
      %1708 = vmatpush1.msra.mxu0 0.0
      %1709 = vmatprep.subr.mxu0 0.0
      %1710 = vmatpush1.msra.mxu0 0.0
      %1711 = vmatprep.subr.mxu0 0.0
      %1712 = vmatpush1.msra.mxu0 0.0
      %1713 = vmatprep.subr.mxu0 0.0
      %1714 = vmatpush1.msra.mxu0 0.0
      %1715 = vmatprep.subr.mxu0 0.0
      %1716 = vmatpush1.msra.mxu0 0.0
      %1717 = vmatprep.mubr.f32.mxu0 0.0
      %v1718 = vand.u32 %v1021, 4294901760
      %1719 = vmatmul.mubr.f32.gmra.mrb[0].mxu0 %v1718
      %v1720 = vpop.f32.mrb[0].mxu0
      %v1721 = vadd.f32 %v1628, %v1720
      %v1722 = vpop.f32.mrb[0].mxu0
      %1723 = vmatprep.mubr.f32.mxu0 0.0
      %v1724 = vand.u32 %v1027, 4294901760
      %1725 = vmatmul.mubr.f32.gmra.mrb[0].mxu0 %v1724
      %v1726 = vpop.f32.mrb[0].mxu0
      %v1727 = vadd.f32 %v1634, %v1726
      %v1728 = vpop.f32.mrb[0].mxu0
      %1729 = vdwg.mxu0
      %v1730 = vld [vmem:[%s251] sm:$0xff]
      %v1731 = vld [vmem:[%s251 + $0x8] sm:$0xff]
      %1732 = vset.pattern.permute.xlu0 0
      %1733 = vperm.xlu0 %1732, %v1730
      %v1734 = vpop.permute.xlu0 %1733
      %1735 = vset.pattern.permute.xlu0 0
      %1736 = vperm.xlu0 %1735, %v1731
      %v1737 = vpop.permute.xlu0 %1736
      %vm1738 = vcmp.eq.s32.totalorder %v1734, %v271
      %vm1739 = vcmp.eq.s32.totalorder %v1737, %v271
      %v1740 = vsel %vm1738, %v1721, 0.0
      %v1741 = vsel %vm1739, %v1727, 0.0
      %1742 = vadd.xlane.f32.xlu0 %v1740
      %v1743 = vpop.xlane.xlu0 %1742
      %1744 = vadd.xlane.f32.xlu0 %v1741
      %v1745 = vpop.xlane.xlu0 %1744
      %v1746 = vmax.f32 %v1743, -10.0
      %v1747 = vmax.f32 %v1745, -10.0
      %v1748 = vmin.f32 %v1746, 10.0
      %v1749 = vmin.f32 %v1747, 10.0
      %v1750 = vand.u32 2147483647, %v1748
      %v1751 = vand.u32 2147483647, %v1749
      %v1752 = vsub.f32 0.0, %v1750
      %v1753 = vsub.f32 0.0, %v1751
      %v1754 = vmul.f32 %v1752, 1.442695
      %v1755 = vpow.pop %v1754
      %v1756 = vmul.f32 %v1753, 1.442695
      %v1757 = vpow.pop %v1756
      %v1758 = vadd.f32 %v1755, 1.0
      %v1759 = vlog2.pop %v1758
      %v1760 = vmul.f32 %v1759, 0.6931472
      %v1761 = vmul.f32 -0.5, %v1755
      %v1762 = vadd.f32 %v1761, 1.0
      %v1763 = vmul.f32 %v1762, %v1755
      %v1764 = vand.u32 2147483647, %v1755
      %vm1765 = vcmp.lt.f32.partialorder %v1764, 0.0004427343
      %v1766 = vsel %vm1765, %v1763, %v1760
      %v1767 = vadd.f32 %v1757, 1.0
      %v1768 = vlog2.pop %v1767
      %v1769 = vmul.f32 %v1768, 0.6931472
      %v1770 = vmul.f32 -0.5, %v1757
      %v1771 = vadd.f32 %v1770, 1.0
      %v1772 = vmul.f32 %v1771, %v1757
      %v1773 = vand.u32 2147483647, %v1757
      %vm1774 = vcmp.lt.f32.partialorder %v1773, 0.0004427343
      %v1775 = vsel %vm1774, %v1772, %v1769
      %v1776 = vmin.f32 %v1748, 0.0
      %v1777 = vmin.f32 %v1749, 0.0
      %v1778 = vsub.f32 %v1766, %v1776
      %v1779 = vsub.f32 %v1775, %v1777
      %v1780 = vld [vmem:[%s263] sm:$0xff]
      %v1781 = vld [vmem:[%s263 + $0x8] sm:$0xff]
      %1782 = vset.pattern.permute.xlu0 0
      %1783 = vperm.xlu0 %1782, %v1780
      %v1784 = vpop.permute.xlu0 %1783
      %1785 = vset.pattern.permute.xlu0 0
      %1786 = vperm.xlu0 %1785, %v1781
      %v1787 = vpop.permute.xlu0 %1786
      %vm1788 = vcmp.eq.s32.totalorder %v1784, %v271
      %vm1789 = vcmp.eq.s32.totalorder %v1787, %v271
      %v1790 = vsel %vm1788, %v1721, 0.0
      %v1791 = vsel %vm1789, %v1727, 0.0
      %1792 = vadd.xlane.f32.xlu0 %v1790
      %v1793 = vpop.xlane.xlu0 %1792
      %1794 = vadd.xlane.f32.xlu0 %v1791
      %v1795 = vpop.xlane.xlu0 %1794
      %v1796 = vmax.f32 %v1793, -10.0
      %v1797 = vmax.f32 %v1795, -10.0
      %v1798 = vmin.f32 %v1796, 10.0
      %v1799 = vmin.f32 %v1797, 10.0
      %v1800 = vsub.f32 0.0, %v1798
      %v1801 = vsub.f32 0.0, %v1799
      %v1802 = vand.u32 2147483647, %v1800
      %v1803 = vand.u32 2147483647, %v1801
      %v1804 = vsub.f32 0.0, %v1802
      %v1805 = vsub.f32 0.0, %v1803
      %v1806 = vmul.f32 %v1804, 1.442695
      %v1807 = vpow.pop %v1806
      %v1808 = vmul.f32 %v1805, 1.442695
      %v1809 = vpow.pop %v1808
      %v1810 = vadd.f32 %v1807, 1.0
      %v1811 = vlog2.pop %v1810
      %v1812 = vmul.f32 %v1811, 0.6931472
      %v1813 = vmul.f32 -0.5, %v1807
      %v1814 = vadd.f32 %v1813, 1.0
      %v1815 = vmul.f32 %v1814, %v1807
      %v1816 = vand.u32 2147483647, %v1807
      %vm1817 = vcmp.lt.f32.partialorder %v1816, 0.0004427343
      %v1818 = vsel %vm1817, %v1815, %v1812
      %v1819 = vadd.f32 %v1809, 1.0
      %v1820 = vlog2.pop %v1819
      %v1821 = vmul.f32 %v1820, 0.6931472
      %v1822 = vmul.f32 -0.5, %v1809
      %v1823 = vadd.f32 %v1822, 1.0
      %v1824 = vmul.f32 %v1823, %v1809
      %v1825 = vand.u32 2147483647, %v1809
      %vm1826 = vcmp.lt.f32.partialorder %v1825, 0.0004427343
      %v1827 = vsel %vm1826, %v1824, %v1821
      %v1828 = vmin.f32 %v1800, 0.0
      %v1829 = vmin.f32 %v1801, 0.0
      %v1830 = vsub.f32 %v1818, %v1828
      %v1831 = vsub.f32 %v1827, %v1829
      %v1832 = vadd.f32 %v1778, %v1830
      %v1833 = vadd.f32 %v1779, %v1831
      %1834 = vset.pattern.permute.xlu0 1
      %1835 = vperm.xlu0 %1834, %v1780
      %v1836 = vpop.permute.xlu0 %1835
      %1837 = vset.pattern.permute.xlu0 1
      %1838 = vperm.xlu0 %1837, %v1781
      %v1839 = vpop.permute.xlu0 %1838
      %vm1840 = vcmp.eq.s32.totalorder %v1836, %v271
      %vm1841 = vcmp.eq.s32.totalorder %v1839, %v271
      %v1842 = vsel %vm1840, %v1721, 0.0
      %v1843 = vsel %vm1841, %v1727, 0.0
      %1844 = vadd.xlane.f32.xlu0 %v1842
      %v1845 = vpop.xlane.xlu0 %1844
      %1846 = vadd.xlane.f32.xlu0 %v1843
      %v1847 = vpop.xlane.xlu0 %1846
      %v1848 = vmax.f32 %v1845, -10.0
      %v1849 = vmax.f32 %v1847, -10.0
      %v1850 = vmin.f32 %v1848, 10.0
      %v1851 = vmin.f32 %v1849, 10.0
      %v1852 = vsub.f32 0.0, %v1850
      %v1853 = vsub.f32 0.0, %v1851
      %v1854 = vand.u32 2147483647, %v1852
      %v1855 = vand.u32 2147483647, %v1853
      %v1856 = vsub.f32 0.0, %v1854
      %v1857 = vsub.f32 0.0, %v1855
      %v1858 = vmul.f32 %v1856, 1.442695
      %v1859 = vpow.pop %v1858
      %v1860 = vmul.f32 %v1857, 1.442695
      %v1861 = vpow.pop %v1860
      %v1862 = vadd.f32 %v1859, 1.0
      %v1863 = vlog2.pop %v1862
      %v1864 = vmul.f32 %v1863, 0.6931472
      %v1865 = vmul.f32 -0.5, %v1859
      %v1866 = vadd.f32 %v1865, 1.0
      %v1867 = vmul.f32 %v1866, %v1859
      %v1868 = vand.u32 2147483647, %v1859
      %vm1869 = vcmp.lt.f32.partialorder %v1868, 0.0004427343
      %v1870 = vsel %vm1869, %v1867, %v1864
      %v1871 = vadd.f32 %v1861, 1.0
      %v1872 = vlog2.pop %v1871
      %v1873 = vmul.f32 %v1872, 0.6931472
      %v1874 = vmul.f32 -0.5, %v1861
      %v1875 = vadd.f32 %v1874, 1.0
      %v1876 = vmul.f32 %v1875, %v1861
      %v1877 = vand.u32 2147483647, %v1861
      %vm1878 = vcmp.lt.f32.partialorder %v1877, 0.0004427343
      %v1879 = vsel %vm1878, %v1876, %v1873
      %v1880 = vmin.f32 %v1852, 0.0
      %v1881 = vmin.f32 %v1853, 0.0
      %v1882 = vsub.f32 %v1870, %v1880
      %v1883 = vsub.f32 %v1879, %v1881
      %v1884 = vadd.f32 %v1832, %v1882
      %v1885 = vadd.f32 %v1833, %v1883
      %1886 = vset.pattern.permute.xlu0 2
      %1887 = vperm.xlu0 %1886, %v1780
      %v1888 = vpop.permute.xlu0 %1887
      %1889 = vset.pattern.permute.xlu0 2
      %1890 = vperm.xlu0 %1889, %v1781
      %v1891 = vpop.permute.xlu0 %1890
      %vm1892 = vcmp.eq.s32.totalorder %v1888, %v271
      %vm1893 = vcmp.eq.s32.totalorder %v1891, %v271
      %v1894 = vsel %vm1892, %v1721, 0.0
      %v1895 = vsel %vm1893, %v1727, 0.0
      %1896 = vadd.xlane.f32.xlu0 %v1894
      %v1897 = vpop.xlane.xlu0 %1896
      %1898 = vadd.xlane.f32.xlu0 %v1895
      %v1899 = vpop.xlane.xlu0 %1898
      %v1900 = vmax.f32 %v1897, -10.0
      %v1901 = vmax.f32 %v1899, -10.0
      %v1902 = vmin.f32 %v1900, 10.0
      %v1903 = vmin.f32 %v1901, 10.0
      %v1904 = vsub.f32 0.0, %v1902
      %v1905 = vsub.f32 0.0, %v1903
      %v1906 = vand.u32 2147483647, %v1904
      %v1907 = vand.u32 2147483647, %v1905
      %v1908 = vsub.f32 0.0, %v1906
      %v1909 = vsub.f32 0.0, %v1907
      %v1910 = vmul.f32 %v1908, 1.442695
      %v1911 = vpow.pop %v1910
      %v1912 = vmul.f32 %v1909, 1.442695
      %v1913 = vpow.pop %v1912
      %v1914 = vadd.f32 %v1911, 1.0
      %v1915 = vlog2.pop %v1914
      %v1916 = vmul.f32 %v1915, 0.6931472
      %v1917 = vmul.f32 -0.5, %v1911
      %v1918 = vadd.f32 %v1917, 1.0
      %v1919 = vmul.f32 %v1918, %v1911
      %v1920 = vand.u32 2147483647, %v1911
      %vm1921 = vcmp.lt.f32.partialorder %v1920, 0.0004427343
      %v1922 = vsel %vm1921, %v1919, %v1916
      %v1923 = vadd.f32 %v1913, 1.0
      %v1924 = vlog2.pop %v1923
      %v1925 = vmul.f32 %v1924, 0.6931472
      %v1926 = vmul.f32 -0.5, %v1913
      %v1927 = vadd.f32 %v1926, 1.0
      %v1928 = vmul.f32 %v1927, %v1913
      %v1929 = vand.u32 2147483647, %v1913
      %vm1930 = vcmp.lt.f32.partialorder %v1929, 0.0004427343
      %v1931 = vsel %vm1930, %v1928, %v1925
      %v1932 = vmin.f32 %v1904, 0.0
      %v1933 = vmin.f32 %v1905, 0.0
      %v1934 = vsub.f32 %v1922, %v1932
      %v1935 = vsub.f32 %v1931, %v1933
      %v1936 = vadd.f32 %v1884, %v1934
      %v1937 = vadd.f32 %v1885, %v1935
      %1938 = vset.pattern.permute.xlu0 3
      %1939 = vperm.xlu0 %1938, %v1780
      %v1940 = vpop.permute.xlu0 %1939
      %1941 = vset.pattern.permute.xlu0 3
      %1942 = vperm.xlu0 %1941, %v1781
      %v1943 = vpop.permute.xlu0 %1942
      %vm1944 = vcmp.eq.s32.totalorder %v1940, %v271
      %vm1945 = vcmp.eq.s32.totalorder %v1943, %v271
      %v1946 = vsel %vm1944, %v1721, 0.0
      %v1947 = vsel %vm1945, %v1727, 0.0
      %1948 = vadd.xlane.f32.xlu0 %v1946
      %v1949 = vpop.xlane.xlu0 %1948
      %1950 = vadd.xlane.f32.xlu0 %v1947
      %v1951 = vpop.xlane.xlu0 %1950
      %v1952 = vmax.f32 %v1949, -10.0
      %v1953 = vmax.f32 %v1951, -10.0
      %v1954 = vmin.f32 %v1952, 10.0
      %v1955 = vmin.f32 %v1953, 10.0
      %v1956 = vsub.f32 0.0, %v1954
      %v1957 = vsub.f32 0.0, %v1955
      %v1958 = vand.u32 2147483647, %v1956
      %v1959 = vand.u32 2147483647, %v1957
      %v1960 = vsub.f32 0.0, %v1958
      %v1961 = vsub.f32 0.0, %v1959
      %v1962 = vmul.f32 %v1960, 1.442695
      %v1963 = vpow.pop %v1962
      %v1964 = vmul.f32 %v1961, 1.442695
      %v1965 = vpow.pop %v1964
      %v1966 = vadd.f32 %v1963, 1.0
      %v1967 = vlog2.pop %v1966
      %v1968 = vmul.f32 %v1967, 0.6931472
      %v1969 = vmul.f32 -0.5, %v1963
      %v1970 = vadd.f32 %v1969, 1.0
      %v1971 = vmul.f32 %v1970, %v1963
      %v1972 = vand.u32 2147483647, %v1963
      %vm1973 = vcmp.lt.f32.partialorder %v1972, 0.0004427343
      %v1974 = vsel %vm1973, %v1971, %v1968
      %v1975 = vadd.f32 %v1965, 1.0
      %v1976 = vlog2.pop %v1975
      %v1977 = vmul.f32 %v1976, 0.6931472
      %v1978 = vmul.f32 -0.5, %v1965
      %v1979 = vadd.f32 %v1978, 1.0
      %v1980 = vmul.f32 %v1979, %v1965
      %v1981 = vand.u32 2147483647, %v1965
      %vm1982 = vcmp.lt.f32.partialorder %v1981, 0.0004427343
      %v1983 = vsel %vm1982, %v1980, %v1977
      %v1984 = vmin.f32 %v1956, 0.0
      %v1985 = vmin.f32 %v1957, 0.0
      %v1986 = vsub.f32 %v1974, %v1984
      %v1987 = vsub.f32 %v1983, %v1985
      %v1988 = vadd.f32 %v1936, %v1986
      %v1989 = vadd.f32 %v1937, %v1987
      %1990 = vset.pattern.permute.xlu0 4
      %1991 = vperm.xlu0 %1990, %v1780
      %v1992 = vpop.permute.xlu0 %1991
      %1993 = vset.pattern.permute.xlu0 4
      %1994 = vperm.xlu0 %1993, %v1781
      %v1995 = vpop.permute.xlu0 %1994
      %vm1996 = vcmp.eq.s32.totalorder %v1992, %v271
      %vm1997 = vcmp.eq.s32.totalorder %v1995, %v271
      %v1998 = vsel %vm1996, %v1721, 0.0
      %v1999 = vsel %vm1997, %v1727, 0.0
      %2000 = vadd.xlane.f32.xlu0 %v1998
      %v2001 = vpop.xlane.xlu0 %2000
      %2002 = vadd.xlane.f32.xlu0 %v1999
      %v2003 = vpop.xlane.xlu0 %2002
      %v2004 = vmax.f32 %v2001, -10.0
      %v2005 = vmax.f32 %v2003, -10.0
      %v2006 = vmin.f32 %v2004, 10.0
      %v2007 = vmin.f32 %v2005, 10.0
      %v2008 = vsub.f32 0.0, %v2006
      %v2009 = vsub.f32 0.0, %v2007
      %v2010 = vand.u32 2147483647, %v2008
      %v2011 = vand.u32 2147483647, %v2009
      %v2012 = vsub.f32 0.0, %v2010
      %v2013 = vsub.f32 0.0, %v2011
      %v2014 = vmul.f32 %v2012, 1.442695
      %v2015 = vpow.pop %v2014
      %v2016 = vmul.f32 %v2013, 1.442695
      %v2017 = vpow.pop %v2016
      %v2018 = vadd.f32 %v2015, 1.0
      %v2019 = vlog2.pop %v2018
      %v2020 = vmul.f32 %v2019, 0.6931472
      %v2021 = vmul.f32 -0.5, %v2015
      %v2022 = vadd.f32 %v2021, 1.0
      %v2023 = vmul.f32 %v2022, %v2015
      %v2024 = vand.u32 2147483647, %v2015
      %vm2025 = vcmp.lt.f32.partialorder %v2024, 0.0004427343
      %v2026 = vsel %vm2025, %v2023, %v2020
      %v2027 = vadd.f32 %v2017, 1.0
      %v2028 = vlog2.pop %v2027
      %v2029 = vmul.f32 %v2028, 0.6931472
      %v2030 = vmul.f32 -0.5, %v2017
      %v2031 = vadd.f32 %v2030, 1.0
      %v2032 = vmul.f32 %v2031, %v2017
      %v2033 = vand.u32 2147483647, %v2017
      %vm2034 = vcmp.lt.f32.partialorder %v2033, 0.0004427343
      %v2035 = vsel %vm2034, %v2032, %v2029
      %v2036 = vmin.f32 %v2008, 0.0
      %v2037 = vmin.f32 %v2009, 0.0
      %v2038 = vsub.f32 %v2026, %v2036
      %v2039 = vsub.f32 %v2035, %v2037
      %v2040 = vadd.f32 %v1988, %v2038
      %v2041 = vadd.f32 %v1989, %v2039
      %2042 = vset.pattern.permute.xlu0 5
      %2043 = vperm.xlu0 %2042, %v1780
      %v2044 = vpop.permute.xlu0 %2043
      %2045 = vset.pattern.permute.xlu0 5
      %2046 = vperm.xlu0 %2045, %v1781
      %v2047 = vpop.permute.xlu0 %2046
      %vm2048 = vcmp.eq.s32.totalorder %v2044, %v271
      %vm2049 = vcmp.eq.s32.totalorder %v2047, %v271
      %v2050 = vsel %vm2048, %v1721, 0.0
      %v2051 = vsel %vm2049, %v1727, 0.0
      %2052 = vadd.xlane.f32.xlu0 %v2050
      %v2053 = vpop.xlane.xlu0 %2052
      %2054 = vadd.xlane.f32.xlu0 %v2051
      %v2055 = vpop.xlane.xlu0 %2054
      %v2056 = vmax.f32 %v2053, -10.0
      %v2057 = vmax.f32 %v2055, -10.0
      %v2058 = vmin.f32 %v2056, 10.0
      %v2059 = vmin.f32 %v2057, 10.0
      %v2060 = vsub.f32 0.0, %v2058
      %v2061 = vsub.f32 0.0, %v2059
      %v2062 = vand.u32 2147483647, %v2060
      %v2063 = vand.u32 2147483647, %v2061
      %v2064 = vsub.f32 0.0, %v2062
      %v2065 = vsub.f32 0.0, %v2063
      %v2066 = vmul.f32 %v2064, 1.442695
      %v2067 = vpow.pop %v2066
      %v2068 = vmul.f32 %v2065, 1.442695
      %v2069 = vpow.pop %v2068
      %v2070 = vadd.f32 %v2067, 1.0
      %v2071 = vlog2.pop %v2070
      %v2072 = vmul.f32 %v2071, 0.6931472
      %v2073 = vmul.f32 -0.5, %v2067
      %v2074 = vadd.f32 %v2073, 1.0
      %v2075 = vmul.f32 %v2074, %v2067
      %v2076 = vand.u32 2147483647, %v2067
      %vm2077 = vcmp.lt.f32.partialorder %v2076, 0.0004427343
      %v2078 = vsel %vm2077, %v2075, %v2072
      %v2079 = vadd.f32 %v2069, 1.0
      %v2080 = vlog2.pop %v2079
      %v2081 = vmul.f32 %v2080, 0.6931472
      %v2082 = vmul.f32 -0.5, %v2069
      %v2083 = vadd.f32 %v2082, 1.0
      %v2084 = vmul.f32 %v2083, %v2069
      %v2085 = vand.u32 2147483647, %v2069
      %vm2086 = vcmp.lt.f32.partialorder %v2085, 0.0004427343
      %v2087 = vsel %vm2086, %v2084, %v2081
      %v2088 = vmin.f32 %v2060, 0.0
      %v2089 = vmin.f32 %v2061, 0.0
      %v2090 = vsub.f32 %v2078, %v2088
      %v2091 = vsub.f32 %v2087, %v2089
      %v2092 = vadd.f32 %v2040, %v2090
      %v2093 = vadd.f32 %v2041, %v2091
      %v2094 = vlaneseq
      %v2095 = vshrl.u32 %v2094, 7
      %v2096 = vadd.s32 %v2095, 8
      %v2097 = vstv %s269
      %v2098 = vadd.s32 %v2097, %v2095
      %v2099 = vadd.s32 %v2097, %v2096
      %vm2100 = vcmp.lt.s32.totalorder %v2098, 24
      %vm2101 = vcmp.lt.s32.totalorder %v2099, 24
      %v2102 = vsel %vm2100, 1, 0
      %v2103 = vsel %vm2101, 1, 0
      %v2104 = vcvt.s32.f32 %v2102
      %v2105 = vcvt.s32.f32 %v2103
      %v2106 = vmul.f32 %v2092, %v2104
      %v2107 = vmul.f32 %v2093, %v2105
      %v2108 = vadd.f32 %v2106, %v2107
      %v2109 = vrot.slane %v2108, 4
      %v2110 = vadd.f32 %v2108, %v2109
      %v2111 = vrot.slane %v2110, 2
      %v2112 = vadd.f32 %v2110, %v2111
      %v2113 = vrot.slane %v2112, 1
      %v2114 = vadd.f32 %v2112, %v2113
      %2115 = vst [vmem:[%s268] sm:$0xff] %v2114
      %p2116 = scmp.lt.s32.totalorder %s16, 1
      %s2117 = scalar_select %p2116, %s16, 1
      %s2118 = smul.addr %s2117, 8
      %s2119 = scalar_lea.vmem %s5, %s2118
      // Predicated region
      $region41: #{cbow_forward.1} parent=39 // pred_check
        %p2120 = pneg %p154
      $region42: #{cbow_forward.1} parent=39 // pred_check_branch
        %2122 = sbr.rel (%p2120) target = $region44
      $region43: #{cbow_forward.1} parent=39 // pred_region
        _
      $region44: #{cbow_forward.1} parent=39 // pred_fallthru
        _
    $region40: #{cbow_forward.1} parent=5 // pred_fallthru
      _
    %p2123 = scmp.le.s32.totalorder 2, %s11
    // Predicated region
    $region45: #{cbow_forward.1} parent=5 // pred_check
      %p2124 = pneg %p2123
    $region46: #{cbow_forward.1} parent=5 // pred_check_branch
      %2126 = sbr.rel (%p2124) target = $region48
    $region47: #{cbow_forward.1} parent=5 // pred_region
      %s2127 = ssub.s32 %s11, 2
      // Predicated region
      $region49: #{cbow_forward.1} parent=47 // pred_check
        %p2128 = pneg %p160
      $region50: #{cbow_forward.1} parent=47 // pred_check_branch
        %2130 = sbr.rel (%p2128) target = $region52
      $region51: #{cbow_forward.1} parent=47 // pred_region
        %p2131 = scmp.lt.s32.totalorder %s17, 1
        %s2132 = scalar_select %p2131, %s17, 1
        %s2133 = smul.addr %s2132, 8
        %s2134 = scalar_lea.vmem %s5, %s2133
      $region52: #{cbow_forward.1} parent=47 // pred_fallthru
        _
    $region48: #{cbow_forward.1} parent=5 // pred_fallthru
      _
  $region6: #{cbow_forward.1} parent=0 // loop_footer
    %s15 = sadd.s32 1, %s11
  $region7: #{cbow_forward.1} parent=0 // loop_footer_branch
    %10 = sbr.rel target = $region3
  $region8: #{cbow_forward.1} parent=0 // loop_exit
    _

</llo_original>
